<compile_context>
chip_gen: v7x
topology: tpu7x:2x2x1
jax: 0.10.0
libtpu: 0.0.40
codegen_flags: <defaults>
</compile_context>

<pallas_src>
import functools

import jax
import jax.numpy as jnp
from jax import lax
from jax.experimental import pallas as pl
from jax.experimental.pallas import tpu as pltpu

EPS = 1e-5
_VMEM_LIMIT = 32 * 1024 * 1024  # explicit scoped-VMEM cap (safe on v5e/v6e/v7x)


# ---------------------------------------------------------------------------
# Kernels
# ---------------------------------------------------------------------------
def pw_stage_kernel(*refs, m_total, tm, fuse_in_affine, needs_mask):
    """[optional bn-affine + ReLU] -> 1x1 conv (matmul) -> pre-BN output + partial stats."""
    if fuse_in_affine:
        x_ref, scale_ref, shift_ref, w_ref, y_ref, sum_ref, ssq_ref = refs
    else:
        x_ref, w_ref, y_ref, sum_ref, ssq_ref = refs
        scale_ref = shift_ref = None

    x = x_ref[...].astype(jnp.float32)                       # (tm, Cin)
    if fuse_in_affine:
        x = jnp.maximum(x * scale_ref[...] + shift_ref[...], 0.0)

    # bf16 MXU matmul, f32 accumulation.
    y = jnp.dot(x.astype(jnp.bfloat16), w_ref[...],
                preferred_element_type=jnp.float32)          # (tm, Cout) f32

    # Partial BN statistics (mask rows of a partial last tile so stats stay exact).
    if needs_mask:
        rows = pl.program_id(0) * tm + lax.broadcasted_iota(jnp.int32, (tm, 1), 0)
        ym = jnp.where(rows < m_total, y, 0.0)
    else:
        ym = y
    sum_ref[...] = jnp.sum(ym, axis=0, keepdims=True)[None]          # (1,1,Cout)
    ssq_ref[...] = jnp.sum(ym * ym, axis=0, keepdims=True)[None]     # (1,1,Cout)

    y_ref[...] = y.astype(y_ref.dtype)


def conv3x3_stage_kernel(x_ref, scale_ref, shift_ref, w_ref, y_ref, sum_ref, ssq_ref):
    """bn1-affine + ReLU -> 3x3 VALID conv as a single im2col matmul -> pre-BN out + stats."""
    x = x_ref[0].astype(jnp.float32)                         # (H, W, C)
    x = jnp.maximum(x * scale_ref[...] + shift_ref[...], 0.0)
    h, w, c = x.shape
    ho, wo = h - 2, w - 2

    # im2col: (Ho*Wo, 9*C) patch matrix, then ONE big-K matmul on the MXU.
    cols = [x[kh:kh + ho, kw:kw + wo, :].reshape(ho * wo, c)
            for kh in range(3) for kw in range(3)]
    patches = jnp.concatenate(cols, axis=-1).astype(jnp.bfloat16)    # (Ho*Wo, 9C)
    y = jnp.dot(patches, w_ref[...], preferred_element_type=jnp.float32)  # (Ho*Wo, C)

    sum_ref[...] = jnp.sum(y, axis=0, keepdims=True)[None]           # (1,1,C)
    ssq_ref[...] = jnp.sum(y * y, axis=0, keepdims=True)[None]
    y_ref[...] = y.reshape(1, ho, wo, c).astype(y_ref.dtype)


def finalize_kernel(y_ref, scale_ref, shift_ref, o_ref):
    y = y_ref[...].astype(jnp.float32) * scale_ref[...] + shift_ref[...]
    o_ref[...] = jnp.maximum(y, 0.0).astype(o_ref.dtype)


def finalize_res_kernel(y_ref, scale_ref, shift_ref, res_ref, o_ref):
    y = y_ref[...].astype(jnp.float32) * scale_ref[...] + shift_ref[...]
    y = y + res_ref[...].astype(jnp.float32)                 # residual before final ReLU
    o_ref[...] = jnp.maximum(y, 0.0).astype(o_ref.dtype)


# ---------------------------------------------------------------------------
# pallas_call wrappers
# ---------------------------------------------------------------------------
def _compiler_params():
    return pltpu.CompilerParams(dimension_semantics=("parallel",),
                                vmem_limit_bytes=_VMEM_LIMIT)


def _pw_stage(x2d, w_bf16, scale=None, shift=None, *, tm_max=1024,
              out_dtype=jnp.bfloat16):
    m, cin = x2d.shape
    cout = w_bf16.shape[1]
    tm = min(tm_max, m)
    g = pl.cdiv(m, tm)
    needs_mask = (m % tm) != 0
    fuse = scale is not None

    kernel = functools.partial(pw_stage_kernel, m_total=m, tm=tm,
                               fuse_in_affine=fuse, needs_mask=needs_mask)

    in_specs = [pl.BlockSpec((tm, cin), lambda i: (i, 0))]
    args = [x2d]
    if fuse:
        in_specs += [pl.BlockSpec((1, cin), lambda i: (0, 0)),
                     pl.BlockSpec((1, cin), lambda i: (0, 0))]
        args += [scale, shift]
    in_specs += [pl.BlockSpec((cin, cout), lambda i: (0, 0))]   # weight pinned (constant idx)
    args += [w_bf16]

    out_shape = (jax.ShapeDtypeStruct((m, cout), out_dtype),
                 jax.ShapeDtypeStruct((g, 1, cout), jnp.float32),
                 jax.ShapeDtypeStruct((g, 1, cout), jnp.float32))
    out_specs = (pl.BlockSpec((tm, cout), lambda i: (i, 0)),
                 pl.BlockSpec((1, 1, cout), lambda i: (i, 0, 0)),
                 pl.BlockSpec((1, 1, cout), lambda i: (i, 0, 0)))

    bytes_accessed = (m * cin * x2d.dtype.itemsize + cin * cout * 2
                      + m * cout * jnp.dtype(out_dtype).itemsize + 2 * g * cout * 4)
    cost = pl.CostEstimate(flops=2 * m * cin * cout, transcendentals=0,
                           bytes_accessed=int(bytes_accessed))

    return pl.pallas_call(
        kernel, grid=(g,), in_specs=in_specs, out_specs=out_specs, out_shape=out_shape,
        compiler_params=_compiler_params(), cost_estimate=cost,
    )(*args)


def _conv3x3_stage(x_nhwc, w2_flat_bf16, scale, shift):
    n, h, w, c = x_nhwc.shape
    ho, wo = h - 2, w - 2

    out_shape = (jax.ShapeDtypeStruct((n, ho, wo, c), jnp.bfloat16),
                 jax.ShapeDtypeStruct((n, 1, c), jnp.float32),
                 jax.ShapeDtypeStruct((n, 1, c), jnp.float32))
    out_specs = (pl.BlockSpec((1, ho, wo, c), lambda i: (i, 0, 0, 0)),
                 pl.BlockSpec((1, 1, c), lambda i: (i, 0, 0)),
                 pl.BlockSpec((1, 1, c), lambda i: (i, 0, 0)))
    in_specs = [pl.BlockSpec((1, h, w, c), lambda i: (i, 0, 0, 0)),
                pl.BlockSpec((1, c), lambda i: (0, 0)),
                pl.BlockSpec((1, c), lambda i: (0, 0)),
                pl.BlockSpec((9 * c, c), lambda i: (0, 0))]

    cost = pl.CostEstimate(
        flops=2 * n * ho * wo * 9 * c * c, transcendentals=0,
        bytes_accessed=int(n * h * w * c * 2 + 9 * c * c * 2
                           + n * ho * wo * c * 2 + 2 * n * c * 4))

    return pl.pallas_call(
        conv3x3_stage_kernel, grid=(n,), in_specs=in_specs, out_specs=out_specs,
        out_shape=out_shape, compiler_params=_compiler_params(), cost_estimate=cost,
    )(x_nhwc, scale, shift, w2_flat_bf16)


def _finalize(y2d, scale, shift, res2d=None, *, tm_max=1024, out_dtype=jnp.float32):
    m, c = y2d.shape
    tm = min(tm_max, m)
    g = pl.cdiv(m, tm)

    in_specs = [pl.BlockSpec((tm, c), lambda i: (i, 0)),
                pl.BlockSpec((1, c), lambda i: (0, 0)),
                pl.BlockSpec((1, c), lambda i: (0, 0))]
    args = [y2d, scale, shift]
    kern = finalize_kernel
    if res2d is not None:
        in_specs.append(pl.BlockSpec((tm, c), lambda i: (i, 0)))
        args.append(res2d)
        kern = finalize_res_kernel

    cost = pl.CostEstimate(flops=3 * m * c, transcendentals=0,
                           bytes_accessed=int((3 + (res2d is not None)) * m * c * 4))

    return pl.pallas_call(
        kern, grid=(g,), in_specs=in_specs,
        out_specs=pl.BlockSpec((tm, c), lambda i: (i, 0)),
        out_shape=jax.ShapeDtypeStruct((m, c), out_dtype),
        compiler_params=_compiler_params(), cost_estimate=cost,
    )(*args)


# ---------------------------------------------------------------------------
# BN stat reduction + affine fold (tiny (C,)-sized XLA ops between kernels)
# ---------------------------------------------------------------------------
def _bn_affine(psum, psumsq, count, gamma, beta):
    s = jnp.sum(psum, axis=(0, 1))
    ss = jnp.sum(psumsq, axis=(0, 1))
    mean = s / count
    var = jnp.maximum(ss / count - mean * mean, 0.0)   # biased var (training-mode BN)
    scale = gamma * lax.rsqrt(var + EPS)
    shift = beta - mean * scale
    return scale.reshape(1, -1), shift.reshape(1, -1)


# ---------------------------------------------------------------------------
# Bottleneck forward
# ---------------------------------------------------------------------------
def bottleneck_forward(x_nchw, params, stride=1, downsample_result_nchw=None):
    """params: w1 (Cin,Cm), w2 (3,3,Cm,Cm) HWIO, w3 (Cm,4Cm), g*/b* (C,) BN affines."""
    if stride != 1:
        # TODO(synk): stride>1 conv2 (strided im2col subsampling) not implemented.
        raise NotImplementedError("only stride=1 supported in this synthetic kernel")

    x = jnp.transpose(x_nchw, (0, 2, 3, 1)).astype(jnp.float32)      # NCHW -> NHWC
    n, h, w, cin = x.shape
    cm = params["w1"].shape[1]
    cout = params["w3"].shape[1]
    ho, wo = h - 2, w - 2                                            # conv2 padding=0
    m1, m2 = n * h * w, n * ho * wo

    w1 = params["w1"].astype(jnp.bfloat16)
    w2 = params["w2"].reshape(9 * cm, cm).astype(jnp.bfloat16)       # (kh,kw,ci) x co
    w3 = params["w3"].astype(jnp.bfloat16)

    # conv1 (1x1) + bn1 partial stats
    y1, s1, ss1 = _pw_stage(x.reshape(m1, cin), w1)
    sc1, sh1 = _bn_affine(s1, ss1, m1, params["g1"], params["b1"])

    # bn1-apply + relu + conv2 (3x3 VALID) + bn2 partial stats
    y2, s2, ss2 = _conv3x3_stage(y1.reshape(n, h, w, cm), w2, sc1, sh1)
    sc2, sh2 = _bn_affine(s2, ss2, m2, params["g2"], params["b2"])

    # bn2-apply + relu + conv3 (1x1) + bn3 partial stats
    y3, s3, ss3 = _pw_stage(y2.reshape(m2, cm), w3, sc2, sh2)
    sc3, sh3 = _bn_affine(s3, ss3, m2, params["g3"], params["b3"])

    # bn3-apply (+ residual, only when downsample result given) + relu
    if downsample_result_nchw is None:
        out2d = _finalize(y3, sc3, sh3)
    else:
        res = jnp.transpose(downsample_result_nchw, (0, 2, 3, 1)).reshape(m2, cout)
        out2d = _finalize(y3, sc3, sh3, res)

    out = out2d.reshape(n, ho, wo, cout)
    return jnp.transpose(out, (0, 3, 1, 2))                          # back to NCHW


# ---------------------------------------------------------------------------
# Pure-JAX reference (f32 end-to-end, independent check)
# ---------------------------------------------------------------------------
def reference_bottleneck(x_nchw, params, downsample_result_nchw=None):
    x = jnp.transpose(x_nchw, (0, 2, 3, 1)).astype(jnp.float32)

    def bn(y, g, b, relu):
        mean = jnp.mean(y, axis=(0, 1, 2), keepdims=True)
        var = jnp.mean((y - mean) ** 2, axis=(0, 1, 2), keepdims=True)
        y = (y - mean) * lax.rsqrt(var + EPS) * g + b
        return jnp.maximum(y, 0.0) if relu else y

    dn = ("NHWC", "HWIO", "NHWC")
    y = lax.conv_general_dilated(x, params["w1"][None, None], (1, 1), "VALID",
                                 dimension_numbers=dn)
    y = bn(y, params["g1"], params["b1"], True)
    y = lax.conv_general_dilated(y, params["w2"], (1, 1), "VALID", dimension_numbers=dn)
    y = bn(y, params["g2"], params["b2"], True)
    y = lax.conv_general_dilated(y, params["w3"][None, None], (1, 1), "VALID",
                                 dimension_numbers=dn)
    y = bn(y, params["g3"], params["b3"], False)
    if downsample_result_nchw is not None:
        y = y + jnp.transpose(downsample_result_nchw, (0, 2, 3, 1))
    y = jnp.maximum(y, 0.0)
    return jnp.transpose(y, (0, 3, 1, 2))


# ---------------------------------------------------------------------------
def make_params(key, in_channel, out_channel):
    expansion = 4
    k1, k2, k3 = jax.random.split(key, 3)
    w1 = 0.1 * jax.random.normal(k1, (in_channel, out_channel), jnp.float32)
    w2 = 0.1 * jax.random.normal(k2, (3, 3, out_channel, out_channel), jnp.float32)
    w3 = 0.1 * jax.random.normal(k3, (out_channel, out_channel * expansion), jnp.float32)
    c1, c2, c3 = out_channel, out_channel, out_channel * expansion
    # PyTorch BatchNorm2d init: gamma=1, beta=0.
    return dict(
        w1=w1, g1=jnp.ones((c1,), jnp.float32), b1=jnp.zeros((c1,), jnp.float32),
        w2=w2, g2=jnp.ones((c2,), jnp.float32), b2=jnp.zeros((c2,), jnp.float32),
        w3=w3, g3=jnp.ones((c3,), jnp.float32), b3=jnp.zeros((c3,), jnp.float32),
    )


if __name__ == "__main__":
    key = jax.random.PRNGKey(0)
    kx, kp, kd = jax.random.split(key, 3)

    # Real ResNet-50 stage-1 channel widths (lane-friendly: 64 / 256), small spatial.
    in_channel, out_channel = 64, 64
    N, H, W = 2, 10, 10                              # conv2 padding=0 -> 8x8 output
    x = jax.random.normal(kx, (N, in_channel, H, W), jnp.float32)    # NCHW like PyTorch
    params = make_params(kp, in_channel, out_channel)

    # bf16 MXU inputs + bf16 intermediates -> looser tolerance vs the f32 reference.
    RTOL, ATOL = 5e-2, 1e-1

    # --- path without downsample (no residual add, matching the source) ---
    fwd = jax.jit(lambda a, p: bottleneck_forward(a, p, stride=1,
                                                  downsample_result_nchw=None))
    out = jax.block_until_ready(fwd(x, params))
    ref = jax.block_until_ready(reference_bottleneck(x, params))
    assert out.shape == (N, out_channel * 4, H - 2, W - 2), out.shape
    assert jnp.allclose(out, ref, rtol=RTOL, atol=ATOL), float(jnp.max(jnp.abs(out - ref)))

    # --- path with a (precomputed) downsample result: residual added before final ReLU ---
    ds = 0.5 * jax.random.normal(kd, (N, out_channel * 4, H - 2, W - 2), jnp.float32)
    fwd_res = jax.jit(lambda a, p, d: bottleneck_forward(a, p, stride=1,
                                                         downsample_result_nchw=d))
    out_r = jax.block_until_ready(fwd_res(x, params, ds))
    ref_r = jax.block_until_ready(reference_bottleneck(x, params, ds))
    assert out_r.shape == (N, out_channel * 4, H - 2, W - 2), out_r.shape
    assert jnp.allclose(out_r, ref_r, rtol=RTOL, atol=ATOL), \
        float(jnp.max(jnp.abs(out_r - ref_r)))

    print("KERNEL_OK")
</pallas_src>

<mosaic_0001>
module attributes {stable_mosaic.version = 11 : i64} {
  func.func @pw_stage_kernel(%arg0: i32, %arg1: memref<200x64xf32, #tpu.memory_space<vmem>>, %arg2: memref<64x64xbf16, #tpu.memory_space<vmem>>, %arg3: memref<200x64xbf16, #tpu.memory_space<vmem>>, %arg4: memref<1x1x64xf32, #tpu.memory_space<vmem>>, %arg5: memref<1x1x64xf32, #tpu.memory_space<vmem>>) attributes {dimension_semantics = [#tpu.dimension_semantics<parallel>], iteration_bounds = array<i64: 1>, scalar_prefetch = 0 : i64, scratch_operands = 0 : i64, tpu.core_type = #tpu.core_type<tc>, window_params = [{transform_indices = @transform_0, window_bounds = array<i64: 200, 64>}, {pipeline_mode = #tpu.pipeline_mode<synchronous>, transform_indices = @transform_1, window_bounds = array<i64: 64, 64>}, {transform_indices = @transform_2, window_bounds = array<i64: 200, 64>}, {transform_indices = @transform_3, window_bounds = array<i64: 1, 1, 64>}, {transform_indices = @transform_4, window_bounds = array<i64: 1, 1, 64>}]} {
    %c0 = arith.constant 0 : index
    %c0_0 = arith.constant 0 : index
    %0 = vector.load %arg1[%c0, %c0_0] : memref<200x64xf32, #tpu.memory_space<vmem>>, vector<200x64xf32>
    %1 = arith.truncf %0 : vector<200x64xf32> to vector<200x64xbf16>
    %c0_1 = arith.constant 0 : index
    %c0_2 = arith.constant 0 : index
    %2 = vector.load %arg2[%c0_1, %c0_2] : memref<64x64xbf16, #tpu.memory_space<vmem>>, vector<64x64xbf16>
    %cst = arith.constant dense<0.000000e+00> : vector<200x64xf32>
    %3 = tpu.matmul %1, %2, %cst {dimension_numbers = #tpu.dot_dimension_numbers<[1], [0], [0], [1], [0, 0, 1, 1], [], []>} : vector<200x64xbf16>, vector<64x64xbf16>, vector<200x64xf32> -> vector<200x64xf32>
    %cst_3 = arith.constant dense<0.000000e+00> : vector<64xf32>
    %4 = vector.multi_reduction <add>, %3, %cst_3 [0] : vector<200x64xf32> to vector<64xf32>
    %5 = vector.shape_cast %4 : vector<64xf32> to vector<1x64xf32>
    %6 = vector.shape_cast %5 : vector<1x64xf32> to vector<1x1x64xf32>
    %c0_4 = arith.constant 0 : index
    %c0_5 = arith.constant 0 : index
    %c0_6 = arith.constant 0 : index
    %7 = vector.load %arg4[%c0_4, %c0_5, %c0_6] : memref<1x1x64xf32, #tpu.memory_space<vmem>>, vector<1x1x64xf32>
    tpu.vector_store %arg4[%c0_4, %c0_5, %c0_6], %6 {strides = array<i32>} : memref<1x1x64xf32, #tpu.memory_space<vmem>>, vector<1x1x64xf32>,
    %8 = arith.mulf %3, %3 : vector<200x64xf32>
    %cst_7 = arith.constant dense<0.000000e+00> : vector<64xf32>
    %9 = vector.multi_reduction <add>, %8, %cst_7 [0] : vector<200x64xf32> to vector<64xf32>
    %10 = vector.shape_cast %9 : vector<64xf32> to vector<1x64xf32>
    %11 = vector.shape_cast %10 : vector<1x64xf32> to vector<1x1x64xf32>
    %c0_8 = arith.constant 0 : index
    %c0_9 = arith.constant 0 : index
    %c0_10 = arith.constant 0 : index
    %12 = vector.load %arg5[%c0_8, %c0_9, %c0_10] : memref<1x1x64xf32, #tpu.memory_space<vmem>>, vector<1x1x64xf32>
    tpu.vector_store %arg5[%c0_8, %c0_9, %c0_10], %11 {strides = array<i32>} : memref<1x1x64xf32, #tpu.memory_space<vmem>>, vector<1x1x64xf32>,
    %13 = arith.truncf %3 : vector<200x64xf32> to vector<200x64xbf16>
    %c0_11 = arith.constant 0 : index
    %c0_12 = arith.constant 0 : index
    %14 = vector.load %arg3[%c0_11, %c0_12] : memref<200x64xbf16, #tpu.memory_space<vmem>>, vector<200x64xbf16>
    tpu.vector_store %arg3[%c0_11, %c0_12], %13 {strides = array<i32>} : memref<200x64xbf16, #tpu.memory_space<vmem>>, vector<200x64xbf16>,
    return
  }
  func.func @transform_0(%arg0: i32) -> (i32, i32) {
    %c0_i32 = arith.constant 0 : i32
    %c0_i32_0 = arith.constant 0 : i32
    return %arg0, %c0_i32 : i32, i32
  }
  func.func @transform_1(%arg0: i32) -> (i32, i32) {
    %c0_i32 = arith.constant 0 : i32
    %c0_i32_0 = arith.constant 0 : i32
    %c0_i32_1 = arith.constant 0 : i32
    return %c0_i32, %c0_i32_0 : i32, i32
  }
  func.func @transform_2(%arg0: i32) -> (i32, i32) {
    %c0_i32 = arith.constant 0 : i32
    %c0_i32_0 = arith.constant 0 : i32
    return %arg0, %c0_i32 : i32, i32
  }
  func.func @transform_3(%arg0: i32) -> (i32, i32, i32) {
    %c0_i32 = arith.constant 0 : i32
    %c0_i32_0 = arith.constant 0 : i32
    %c0_i32_1 = arith.constant 0 : i32
    return %arg0, %c0_i32, %c0_i32_0 : i32, i32, i32
  }
  func.func @transform_4(%arg0: i32) -> (i32, i32, i32) {
    %c0_i32 = arith.constant 0 : i32
    %c0_i32_0 = arith.constant 0 : i32
    %c0_i32_1 = arith.constant 0 : i32
    return %arg0, %c0_i32, %c0_i32_0 : i32, i32, i32
  }
}

module attributes {stable_mosaic.version = 11 : i64} {
  func.func @conv3x3_stage_kernel(%arg0: i32, %arg1: memref<1x10x10x64xbf16, #tpu.memory_space<vmem>>, %arg2: memref<1x64xf32, #tpu.memory_space<vmem>>, %arg3: memref<1x64xf32, #tpu.memory_space<vmem>>, %arg4: memref<576x64xbf16, #tpu.memory_space<vmem>>, %arg5: memref<1x8x8x64xbf16, #tpu.memory_space<vmem>>, %arg6: memref<1x1x64xf32, #tpu.memory_space<vmem>>, %arg7: memref<1x1x64xf32, #tpu.memory_space<vmem>>) attributes {dimension_semantics = [#tpu.dimension_semantics<parallel>], iteration_bounds = array<i64: 2>, scalar_prefetch = 0 : i64, scratch_operands = 0 : i64, tpu.core_type = #tpu.core_type<tc>, window_params = [{transform_indices = @transform_0, window_bounds = array<i64: 1, 10, 10, 64>}, {pipeline_mode = #tpu.pipeline_mode<synchronous>, transform_indices = @transform_1, window_bounds = array<i64: 1, 64>}, {pipeline_mode = #tpu.pipeline_mode<synchronous>, transform_indices = @transform_2, window_bounds = array<i64: 1, 64>}, {pipeline_mode = #tpu.pipeline_mode<synchronous>, transform_indices = @transform_3, window_bounds = array<i64: 576, 64>}, {transform_indices = @transform_4, window_bounds = array<i64: 1, 8, 8, 64>}, {transform_indices = @transform_5, window_bounds = array<i64: 1, 1, 64>}, {transform_indices = @transform_6, window_bounds = array<i64: 1, 1, 64>}]} {
    %c0 = arith.constant 0 : index
    %c0_0 = arith.constant 0 : index
    %c0_1 = arith.constant 0 : index
    %c0_2 = arith.constant 0 : index
    %0 = vector.load %arg1[%c0, %c0_0, %c0_1, %c0_2] : memref<1x10x10x64xbf16, #tpu.memory_space<vmem>>, vector<1x10x10x64xbf16>
    %1 = vector.shape_cast %0 : vector<1x10x10x64xbf16> to vector<10x10x64xbf16>
    %2 = arith.extf %1 : vector<10x10x64xbf16> to vector<10x10x64xf32>
    %c0_3 = arith.constant 0 : index
    %c0_4 = arith.constant 0 : index
    %3 = vector.load %arg2[%c0_3, %c0_4] : memref<1x64xf32, #tpu.memory_space<vmem>>, vector<1x64xf32>
    %4 = vector.shape_cast %3 : vector<1x64xf32> to vector<1x1x64xf32>
    %5 = vector.broadcast %4 : vector<1x1x64xf32> to vector<10x10x64xf32>
    %6 = arith.mulf %2, %5 : vector<10x10x64xf32>
    %c0_5 = arith.constant 0 : index
    %c0_6 = arith.constant 0 : index
    %7 = vector.load %arg3[%c0_5, %c0_6] : memref<1x64xf32, #tpu.memory_space<vmem>>, vector<1x64xf32>
    %8 = vector.shape_cast %7 : vector<1x64xf32> to vector<1x1x64xf32>
    %9 = vector.broadcast %8 : vector<1x1x64xf32> to vector<10x10x64xf32>
    %10 = arith.addf %6, %9 : vector<10x10x64xf32>
    %cst = arith.constant 0.000000e+00 : f32
    %11 = vector.broadcast %cst : f32 to vector<10x10x64xf32>
    %12 = arith.maximumf %10, %11 : vector<10x10x64xf32>
    %13 = vector.extract_strided_slice %12 {offsets = [0, 0, 0], sizes = [8, 8, 64], strides = [1, 1, 1]} : vector<10x10x64xf32> to vector<8x8x64xf32>
    %14 = vector.shape_cast %13 : vector<8x8x64xf32> to vector<64x64xf32>
    %15 = vector.extract_strided_slice %12 {offsets = [0, 1, 0], sizes = [8, 8, 64], strides = [1, 1, 1]} : vector<10x10x64xf32> to vector<8x8x64xf32>
    %16 = vector.shape_cast %15 : vector<8x8x64xf32> to vector<64x64xf32>
    %17 = vector.extract_strided_slice %12 {offsets = [0, 2, 0], sizes = [8, 8, 64], strides = [1, 1, 1]} : vector<10x10x64xf32> to vector<8x8x64xf32>
    %18 = vector.shape_cast %17 : vector<8x8x64xf32> to vector<64x64xf32>
    %19 = vector.extract_strided_slice %12 {offsets = [1, 0, 0], sizes = [8, 8, 64], strides = [1, 1, 1]} : vector<10x10x64xf32> to vector<8x8x64xf32>
    %20 = vector.shape_cast %19 : vector<8x8x64xf32> to vector<64x64xf32>
    %21 = vector.extract_strided_slice %12 {offsets = [1, 1, 0], sizes = [8, 8, 64], strides = [1, 1, 1]} : vector<10x10x64xf32> to vector<8x8x64xf32>
    %22 = vector.shape_cast %21 : vector<8x8x64xf32> to vector<64x64xf32>
    %23 = vector.extract_strided_slice %12 {offsets = [1, 2, 0], sizes = [8, 8, 64], strides = [1, 1, 1]} : vector<10x10x64xf32> to vector<8x8x64xf32>
    %24 = vector.shape_cast %23 : vector<8x8x64xf32> to vector<64x64xf32>
    %25 = vector.extract_strided_slice %12 {offsets = [2, 0, 0], sizes = [8, 8, 64], strides = [1, 1, 1]} : vector<10x10x64xf32> to vector<8x8x64xf32>
    %26 = vector.shape_cast %25 : vector<8x8x64xf32> to vector<64x64xf32>
    %27 = vector.extract_strided_slice %12 {offsets = [2, 1, 0], sizes = [8, 8, 64], strides = [1, 1, 1]} : vector<10x10x64xf32> to vector<8x8x64xf32>
    %28 = vector.shape_cast %27 : vector<8x8x64xf32> to vector<64x64xf32>
    %29 = vector.extract_strided_slice %12 {offsets = [2, 2, 0], sizes = [8, 8, 64], strides = [1, 1, 1]} : vector<10x10x64xf32> to vector<8x8x64xf32>
    %30 = vector.shape_cast %29 : vector<8x8x64xf32> to vector<64x64xf32>
    %31 = tpu.concatenate %14, %16, %18, %20, %22, %24, %26, %28, %30 in 1 : vector<64x64xf32>, vector<64x64xf32>, vector<64x64xf32>, vector<64x64xf32>, vector<64x64xf32>, vector<64x64xf32>, vector<64x64xf32>, vector<64x64xf32>, vector<64x64xf32> -> vector<64x576xf32>
    %32 = arith.truncf %31 : vector<64x576xf32> to vector<64x576xbf16>
    %c0_7 = arith.constant 0 : index
    %c0_8 = arith.constant 0 : index
    %33 = vector.load %arg4[%c0_7, %c0_8] : memref<576x64xbf16, #tpu.memory_space<vmem>>, vector<576x64xbf16>
    %cst_9 = arith.constant dense<0.000000e+00> : vector<64x64xf32>
    %34 = tpu.matmul %32, %33, %cst_9 {dimension_numbers = #tpu.dot_dimension_numbers<[1], [0], [0], [1], [0, 0, 1, 1], [], []>} : vector<64x576xbf16>, vector<576x64xbf16>, vector<64x64xf32> -> vector<64x64xf32>
    %cst_10 = arith.constant dense<0.000000e+00> : vector<64xf32>
    %35 = vector.multi_reduction <add>, %34, %cst_10 [0] : vector<64x64xf32> to vector<64xf32>
    %36 = vector.shape_cast %35 : vector<64xf32> to vector<1x64xf32>
    %37 = vector.shape_cast %36 : vector<1x64xf32> to vector<1x1x64xf32>
    %c0_11 = arith.constant 0 : index
    %c0_12 = arith.constant 0 : index
    %c0_13 = arith.constant 0 : index
    %38 = vector.load %arg6[%c0_11, %c0_12, %c0_13] : memref<1x1x64xf32, #tpu.memory_space<vmem>>, vector<1x1x64xf32>
    tpu.vector_store %arg6[%c0_11, %c0_12, %c0_13], %37 {strides = array<i32>} : memref<1x1x64xf32, #tpu.memory_space<vmem>>, vector<1x1x64xf32>,
    %39 = arith.mulf %34, %34 : vector<64x64xf32>
    %cst_14 = arith.constant dense<0.000000e+00> : vector<64xf32>
    %40 = vector.multi_reduction <add>, %39, %cst_14 [0] : vector<64x64xf32> to vector<64xf32>
    %41 = vector.shape_cast %40 : vector<64xf32> to vector<1x64xf32>
    %42 = vector.shape_cast %41 : vector<1x64xf32> to vector<1x1x64xf32>
    %c0_15 = arith.constant 0 : index
    %c0_16 = arith.constant 0 : index
    %c0_17 = arith.constant 0 : index
    %43 = vector.load %arg7[%c0_15, %c0_16, %c0_17] : memref<1x1x64xf32, #tpu.memory_space<vmem>>, vector<1x1x64xf32>
    tpu.vector_store %arg7[%c0_15, %c0_16, %c0_17], %42 {strides = array<i32>} : memref<1x1x64xf32, #tpu.memory_space<vmem>>, vector<1x1x64xf32>,
    %44 = vector.shape_cast %34 : vector<64x64xf32> to vector<1x8x8x64xf32>
    %45 = arith.truncf %44 : vector<1x8x8x64xf32> to vector<1x8x8x64xbf16>
    %c0_18 = arith.constant 0 : index
    %c0_19 = arith.constant 0 : index
    %c0_20 = arith.constant 0 : index
    %c0_21 = arith.constant 0 : index
    %46 = vector.load %arg5[%c0_18, %c0_19, %c0_20, %c0_21] : memref<1x8x8x64xbf16, #tpu.memory_space<vmem>>, vector<1x8x8x64xbf16>
    tpu.vector_store %arg5[%c0_18, %c0_19, %c0_20, %c0_21], %45 {strides = array<i32>} : memref<1x8x8x64xbf16, #tpu.memory_space<vmem>>, vector<1x8x8x64xbf16>,
    return
  }
  func.func @transform_0(%arg0: i32) -> (i32, i32, i32, i32) {
    %c0_i32 = arith.constant 0 : i32
    %c0_i32_0 = arith.constant 0 : i32
    %c0_i32_1 = arith.constant 0 : i32
    %c0_i32_2 = arith.constant 0 : i32
    return %arg0, %c0_i32, %c0_i32_0, %c0_i32_1 : i32, i32, i32, i32
  }
  func.func @transform_1(%arg0: i32) -> (i32, i32) {
    %c0_i32 = arith.constant 0 : i32
    %c0_i32_0 = arith.constant 0 : i32
    %c0_i32_1 = arith.constant 0 : i32
    return %c0_i32, %c0_i32_0 : i32, i32
  }
  func.func @transform_2(%arg0: i32) -> (i32, i32) {
    %c0_i32 = arith.constant 0 : i32
    %c0_i32_0 = arith.constant 0 : i32
    %c0_i32_1 = arith.constant 0 : i32
    return %c0_i32, %c0_i32_0 : i32, i32
  }
  func.func @transform_3(%arg0: i32) -> (i32, i32) {
    %c0_i32 = arith.constant 0 : i32
    %c0_i32_0 = arith.constant 0 : i32
    %c0_i32_1 = arith.constant 0 : i32
    return %c0_i32, %c0_i32_0 : i32, i32
  }
  func.func @transform_4(%arg0: i32) -> (i32, i32, i32, i32) {
    %c0_i32 = arith.constant 0 : i32
    %c0_i32_0 = arith.constant 0 : i32
    %c0_i32_1 = arith.constant 0 : i32
    %c0_i32_2 = arith.constant 0 : i32
    return %arg0, %c0_i32, %c0_i32_0, %c0_i32_1 : i32, i32, i32, i32
  }
  func.func @transform_5(%arg0: i32) -> (i32, i32, i32) {
    %c0_i32 = arith.constant 0 : i32
    %c0_i32_0 = arith.constant 0 : i32
    %c0_i32_1 = arith.constant 0 : i32
    return %arg0, %c0_i32, %c0_i32_0 : i32, i32, i32
  }
  func.func @transform_6(%arg0: i32) -> (i32, i32, i32) {
    %c0_i32 = arith.constant 0 : i32
    %c0_i32_0 = arith.constant 0 : i32
    %c0_i32_1 = arith.constant 0 : i32
    return %arg0, %c0_i32, %c0_i32_0 : i32, i32, i32
  }
}

module attributes {stable_mosaic.version = 11 : i64} {
  func.func @pw_stage_kernel(%arg0: i32, %arg1: memref<128x64xbf16, #tpu.memory_space<vmem>>, %arg2: memref<1x64xf32, #tpu.memory_space<vmem>>, %arg3: memref<1x64xf32, #tpu.memory_space<vmem>>, %arg4: memref<64x256xbf16, #tpu.memory_space<vmem>>, %arg5: memref<128x256xbf16, #tpu.memory_space<vmem>>, %arg6: memref<1x1x256xf32, #tpu.memory_space<vmem>>, %arg7: memref<1x1x256xf32, #tpu.memory_space<vmem>>) attributes {dimension_semantics = [#tpu.dimension_semantics<parallel>], iteration_bounds = array<i64: 1>, scalar_prefetch = 0 : i64, scratch_operands = 0 : i64, tpu.core_type = #tpu.core_type<tc>, window_params = [{transform_indices = @transform_0, window_bounds = array<i64: 128, 64>}, {pipeline_mode = #tpu.pipeline_mode<synchronous>, transform_indices = @transform_1, window_bounds = array<i64: 1, 64>}, {pipeline_mode = #tpu.pipeline_mode<synchronous>, transform_indices = @transform_2, window_bounds = array<i64: 1, 64>}, {pipeline_mode = #tpu.pipeline_mode<synchronous>, transform_indices = @transform_3, window_bounds = array<i64: 64, 256>}, {transform_indices = @transform_4, window_bounds = array<i64: 128, 256>}, {transform_indices = @transform_5, window_bounds = array<i64: 1, 1, 256>}, {transform_indices = @transform_6, window_bounds = array<i64: 1, 1, 256>}]} {
    %c0 = arith.constant 0 : index
    %c0_0 = arith.constant 0 : index
    %0 = vector.load %arg1[%c0, %c0_0] : memref<128x64xbf16, #tpu.memory_space<vmem>>, vector<128x64xbf16>
    %1 = arith.extf %0 : vector<128x64xbf16> to vector<128x64xf32>
    %c0_1 = arith.constant 0 : index
    %c0_2 = arith.constant 0 : index
    %2 = vector.load %arg2[%c0_1, %c0_2] : memref<1x64xf32, #tpu.memory_space<vmem>>, vector<1x64xf32>
    %3 = vector.broadcast %2 : vector<1x64xf32> to vector<128x64xf32>
    %4 = arith.mulf %1, %3 : vector<128x64xf32>
    %c0_3 = arith.constant 0 : index
    %c0_4 = arith.constant 0 : index
    %5 = vector.load %arg3[%c0_3, %c0_4] : memref<1x64xf32, #tpu.memory_space<vmem>>, vector<1x64xf32>
    %6 = vector.broadcast %5 : vector<1x64xf32> to vector<128x64xf32>
    %7 = arith.addf %4, %6 : vector<128x64xf32>
    %cst = arith.constant 0.000000e+00 : f32
    %8 = vector.broadcast %cst : f32 to vector<128x64xf32>
    %9 = arith.maximumf %7, %8 : vector<128x64xf32>
    %10 = arith.truncf %9 : vector<128x64xf32> to vector<128x64xbf16>
    %c0_5 = arith.constant 0 : index
    %c0_6 = arith.constant 0 : index
    %11 = vector.load %arg4[%c0_5, %c0_6] : memref<64x256xbf16, #tpu.memory_space<vmem>>, vector<64x256xbf16>
    %cst_7 = arith.constant dense<0.000000e+00> : vector<128x256xf32>
    %12 = tpu.matmul %10, %11, %cst_7 {dimension_numbers = #tpu.dot_dimension_numbers<[1], [0], [0], [1], [0, 0, 1, 1], [], []>} : vector<128x64xbf16>, vector<64x256xbf16>, vector<128x256xf32> -> vector<128x256xf32>
    %cst_8 = arith.constant dense<0.000000e+00> : vector<256xf32>
    %13 = vector.multi_reduction <add>, %12, %cst_8 [0] : vector<128x256xf32> to vector<256xf32>
    %14 = vector.shape_cast %13 : vector<256xf32> to vector<1x256xf32>
    %15 = vector.shape_cast %14 : vector<1x256xf32> to vector<1x1x256xf32>
    %c0_9 = arith.constant 0 : index
    %c0_10 = arith.constant 0 : index
    %c0_11 = arith.constant 0 : index
    %16 = vector.load %arg6[%c0_9, %c0_10, %c0_11] : memref<1x1x256xf32, #tpu.memory_space<vmem>>, vector<1x1x256xf32>
    tpu.vector_store %arg6[%c0_9, %c0_10, %c0_11], %15 {strides = array<i32>} : memref<1x1x256xf32, #tpu.memory_space<vmem>>, vector<1x1x256xf32>,
    %17 = arith.mulf %12, %12 : vector<128x256xf32>
    %cst_12 = arith.constant dense<0.000000e+00> : vector<256xf32>
    %18 = vector.multi_reduction <add>, %17, %cst_12 [0] : vector<128x256xf32> to vector<256xf32>
    %19 = vector.shape_cast %18 : vector<256xf32> to vector<1x256xf32>
    %20 = vector.shape_cast %19 : vector<1x256xf32> to vector<1x1x256xf32>
    %c0_13 = arith.constant 0 : index
    %c0_14 = arith.constant 0 : index
    %c0_15 = arith.constant 0 : index
    %21 = vector.load %arg7[%c0_13, %c0_14, %c0_15] : memref<1x1x256xf32, #tpu.memory_space<vmem>>, vector<1x1x256xf32>
    tpu.vector_store %arg7[%c0_13, %c0_14, %c0_15], %20 {strides = array<i32>} : memref<1x1x256xf32, #tpu.memory_space<vmem>>, vector<1x1x256xf32>,
    %22 = arith.truncf %12 : vector<128x256xf32> to vector<128x256xbf16>
    %c0_16 = arith.constant 0 : index
    %c0_17 = arith.constant 0 : index
    %23 = vector.load %arg5[%c0_16, %c0_17] : memref<128x256xbf16, #tpu.memory_space<vmem>>, vector<128x256xbf16>
    tpu.vector_store %arg5[%c0_16, %c0_17], %22 {strides = array<i32>} : memref<128x256xbf16, #tpu.memory_space<vmem>>, vector<128x256xbf16>,
    return
  }
  func.func @transform_0(%arg0: i32) -> (i32, i32) {
    %c0_i32 = arith.constant 0 : i32
    %c0_i32_0 = arith.constant 0 : i32
    return %arg0, %c0_i32 : i32, i32
  }
  func.func @transform_1(%arg0: i32) -> (i32, i32) {
    %c0_i32 = arith.constant 0 : i32
    %c0_i32_0 = arith.constant 0 : i32
    %c0_i32_1 = arith.constant 0 : i32
    return %c0_i32, %c0_i32_0 : i32, i32
  }
  func.func @transform_2(%arg0: i32) -> (i32, i32) {
    %c0_i32 = arith.constant 0 : i32
    %c0_i32_0 = arith.constant 0 : i32
    %c0_i32_1 = arith.constant 0 : i32
    return %c0_i32, %c0_i32_0 : i32, i32
  }
  func.func @transform_3(%arg0: i32) -> (i32, i32) {
    %c0_i32 = arith.constant 0 : i32
    %c0_i32_0 = arith.constant 0 : i32
    %c0_i32_1 = arith.constant 0 : i32
    return %c0_i32, %c0_i32_0 : i32, i32
  }
  func.func @transform_4(%arg0: i32) -> (i32, i32) {
    %c0_i32 = arith.constant 0 : i32
    %c0_i32_0 = arith.constant 0 : i32
    return %arg0, %c0_i32 : i32, i32
  }
  func.func @transform_5(%arg0: i32) -> (i32, i32, i32) {
    %c0_i32 = arith.constant 0 : i32
    %c0_i32_0 = arith.constant 0 : i32
    %c0_i32_1 = arith.constant 0 : i32
    return %arg0, %c0_i32, %c0_i32_0 : i32, i32, i32
  }
  func.func @transform_6(%arg0: i32) -> (i32, i32, i32) {
    %c0_i32 = arith.constant 0 : i32
    %c0_i32_0 = arith.constant 0 : i32
    %c0_i32_1 = arith.constant 0 : i32
    return %arg0, %c0_i32, %c0_i32_0 : i32, i32, i32
  }
}

module attributes {stable_mosaic.version = 11 : i64} {
  func.func @finalize_kernel(%arg0: i32, %arg1: memref<128x256xbf16, #tpu.memory_space<vmem>>, %arg2: memref<1x256xf32, #tpu.memory_space<vmem>>, %arg3: memref<1x256xf32, #tpu.memory_space<vmem>>, %arg4: memref<128x256xf32, #tpu.memory_space<vmem>>) attributes {dimension_semantics = [#tpu.dimension_semantics<parallel>], iteration_bounds = array<i64: 1>, scalar_prefetch = 0 : i64, scratch_operands = 0 : i64, tpu.core_type = #tpu.core_type<tc>, window_params = [{transform_indices = @transform_0, window_bounds = array<i64: 128, 256>}, {pipeline_mode = #tpu.pipeline_mode<synchronous>, transform_indices = @transform_1, window_bounds = array<i64: 1, 256>}, {pipeline_mode = #tpu.pipeline_mode<synchronous>, transform_indices = @transform_2, window_bounds = array<i64: 1, 256>}, {transform_indices = @transform_3, window_bounds = array<i64: 128, 256>}]} {
    %c0 = arith.constant 0 : index
    %c0_0 = arith.constant 0 : index
    %0 = vector.load %arg1[%c0, %c0_0] : memref<128x256xbf16, #tpu.memory_space<vmem>>, vector<128x256xbf16>
    %1 = arith.extf %0 : vector<128x256xbf16> to vector<128x256xf32>
    %c0_1 = arith.constant 0 : index
    %c0_2 = arith.constant 0 : index
    %2 = vector.load %arg2[%c0_1, %c0_2] : memref<1x256xf32, #tpu.memory_space<vmem>>, vector<1x256xf32>
    %3 = vector.broadcast %2 : vector<1x256xf32> to vector<128x256xf32>
    %4 = arith.mulf %1, %3 : vector<128x256xf32>
    %c0_3 = arith.constant 0 : index
    %c0_4 = arith.constant 0 : index
    %5 = vector.load %arg3[%c0_3, %c0_4] : memref<1x256xf32, #tpu.memory_space<vmem>>, vector<1x256xf32>
    %6 = vector.broadcast %5 : vector<1x256xf32> to vector<128x256xf32>
    %7 = arith.addf %4, %6 : vector<128x256xf32>
    %cst = arith.constant 0.000000e+00 : f32
    %8 = vector.broadcast %cst : f32 to vector<128x256xf32>
    %9 = arith.maximumf %7, %8 : vector<128x256xf32>
    %c0_5 = arith.constant 0 : index
    %c0_6 = arith.constant 0 : index
    %10 = vector.load %arg4[%c0_5, %c0_6] : memref<128x256xf32, #tpu.memory_space<vmem>>, vector<128x256xf32>
    tpu.vector_store %arg4[%c0_5, %c0_6], %9 {strides = array<i32>} : memref<128x256xf32, #tpu.memory_space<vmem>>, vector<128x256xf32>,
    return
  }
  func.func @transform_0(%arg0: i32) -> (i32, i32) {
    %c0_i32 = arith.constant 0 : i32
    %c0_i32_0 = arith.constant 0 : i32
    return %arg0, %c0_i32 : i32, i32
  }
  func.func @transform_1(%arg0: i32) -> (i32, i32) {
    %c0_i32 = arith.constant 0 : i32
    %c0_i32_0 = arith.constant 0 : i32
    %c0_i32_1 = arith.constant 0 : i32
    return %c0_i32, %c0_i32_0 : i32, i32
  }
  func.func @transform_2(%arg0: i32) -> (i32, i32) {
    %c0_i32 = arith.constant 0 : i32
    %c0_i32_0 = arith.constant 0 : i32
    %c0_i32_1 = arith.constant 0 : i32
    return %c0_i32, %c0_i32_0 : i32, i32
  }
  func.func @transform_3(%arg0: i32) -> (i32, i32) {
    %c0_i32 = arith.constant 0 : i32
    %c0_i32_0 = arith.constant 0 : i32
    return %arg0, %c0_i32 : i32, i32
  }
}

</mosaic_0001>

<llo_original>
// kernel: _lambda_.4
$region0: #{_lambda_.4}
  #allocation0 [shape = 'u32[]', space=smem, size = 0x4, offset = 0x4, fixed_abs, tag = 'smem constant byte address 0x4 - core index']
  #allocation1 [shape = 'u32[144,128]{1,0:T(1,128)}', space=vmem, size = 0x12000, scoped, tag = 'internal scratch']
  %s0 = inlined_call_operand.vmem [shape: f32[200,64], index: 0, kind: input, shape index: {}]
  %s1 = inlined_call_operand.vmem [shape: bf16[64,64], index: 1, kind: input, shape index: {}]
  %s2 = inlined_call_operand.vmem [shape: bf16[200,64], index: 2, kind: output, shape index: {0}]
  %s3 = inlined_call_operand.vmem [shape: f32[1,1,64], index: 3, kind: output, shape index: {1}]
  %s4 = inlined_call_operand.vmem [shape: f32[1,1,64], index: 4, kind: output, shape index: {2}]
  %5 = xla_tuple %s2, %s3, %s4
  %s6 = sld [smem:[#allocation0]]
  $region34: #{_lambda_.4} parent=0
    _
  %s8 = ssub.s32 1, %s6
  %s9 = scalar_select 0, %s8, %s6
  // Predicated region
  $region2: #{_lambda_.4} parent=0 // pred_check
    _
  $region3: #{_lambda_.4} parent=0 // pred_check_branch
    %11 = sbr.rel (0) target = $region5
  $region4: #{_lambda_.4} parent=0 // pred_region
    _
  $region5: #{_lambda_.4} parent=0 // pred_fallthru
    _
  // Predicated region
  $region6: #{_lambda_.4} parent=0 // pred_check
    _
  $region7: #{_lambda_.4} parent=0 // pred_check_branch
    %13 = sbr.rel (0) target = $region9
  $region8: #{_lambda_.4} parent=0 // pred_region
    _
  $region9: #{_lambda_.4} parent=0 // pred_fallthru
    _
  %v15 = vld [vmem:[%s0] sm:$0xff]
  %v16 = vld [vmem:[%s0 + $0x8] sm:$0xff]
  %v17 = vld [vmem:[%s0 + $0x10] sm:$0xff]
  %v18 = vld [vmem:[%s0 + $0x18] sm:$0xff]
  %v19 = vld [vmem:[%s0 + $0x20] sm:$0xff]
  %v20 = vld [vmem:[%s0 + $0x28] sm:$0xff]
  %v21 = vld [vmem:[%s0 + $0x30] sm:$0xff]
  %v22 = vld [vmem:[%s0 + $0x38] sm:$0xff]
  %v23 = vld [vmem:[%s0 + $0x40] sm:$0xff]
  %v24 = vld [vmem:[%s0 + $0x48] sm:$0xff]
  %v25 = vld [vmem:[%s0 + $0x50] sm:$0xff]
  %v26 = vld [vmem:[%s0 + $0x58] sm:$0xff]
  %v27 = vld [vmem:[%s0 + $0x60] sm:$0xff]
  %v28 = vld [vmem:[%s0 + $0x68] sm:$0xff]
  %v29 = vld [vmem:[%s0 + $0x70] sm:$0xff]
  %v30 = vld [vmem:[%s0 + $0x78] sm:$0xff]
  %v31 = vld [vmem:[%s0 + $0x80] sm:$0xff]
  %v32 = vld [vmem:[%s0 + $0x88] sm:$0xff]
  %v33 = vld [vmem:[%s0 + $0x90] sm:$0xff]
  %v34 = vld [vmem:[%s0 + $0x98] sm:$0xff]
  %v35 = vld [vmem:[%s0 + $0xa0] sm:$0xff]
  %v36 = vld [vmem:[%s0 + $0xa8] sm:$0xff]
  %v37 = vld [vmem:[%s0 + $0xb0] sm:$0xff]
  %v38 = vld [vmem:[%s0 + $0xb8] sm:$0xff]
  %v39 = vld [vmem:[%s0 + $0xc0] sm:$0xff]
  %v40 = vpack.c.bf16 %v16, %v15
  %v41 = vpack.c.bf16 %v18, %v17
  %v42 = vpack.c.bf16 %v20, %v19
  %v43 = vpack.c.bf16 %v22, %v21
  %v44 = vpack.c.bf16 %v24, %v23
  %v45 = vpack.c.bf16 %v26, %v25
  %v46 = vpack.c.bf16 %v28, %v27
  %v47 = vpack.c.bf16 %v30, %v29
  %v48 = vpack.c.bf16 %v32, %v31
  %v49 = vpack.c.bf16 %v34, %v33
  %v50 = vpack.c.bf16 %v36, %v35
  %v51 = vpack.c.bf16 %v38, %v37
  %v52 = vpack.c.bf16 %v39, %v39
  %v53 = vld [vmem:[%s1] sm:$0xf]
  %v54 = vld [vmem:[%s1 + $0x4] sm:$0xf]
  %v55 = vld [vmem:[%s1 + $0x8] sm:$0xf]
  %v56 = vld [vmem:[%s1 + $0xc] sm:$0xf]
  %v57 = vld [vmem:[%s1 + $0x10] sm:$0xf]
  %v58 = vld [vmem:[%s1 + $0x14] sm:$0xf]
  %v59 = vld [vmem:[%s1 + $0x18] sm:$0xf]
  %v60 = vld [vmem:[%s1 + $0x1c] sm:$0xf]
  %v69 = vunpack.c.l.b16 %v53
  %v70 = vunpack.c.l.b16 %v54
  %v71 = vunpack.c.l.b16 %v55
  %v72 = vunpack.c.l.b16 %v56
  %v73 = vunpack.c.l.b16 %v57
  %v74 = vunpack.c.l.b16 %v58
  %v75 = vunpack.c.l.b16 %v59
  %v76 = vunpack.c.l.b16 %v60
  %v77 = vpack.c.b16 %v70, %v69
  %v78 = vpack.c.b16 %v72, %v71
  %v79 = vpack.c.b16 %v74, %v73
  %v80 = vpack.c.b16 %v76, %v75
  %vm85 = vcmask 523264
  %v87 = vsel %vm85, %v40, 0
  %v90 = vsel %vm85, %v41, 0
  %v93 = vsel %vm85, %v42, 0
  %v96 = vsel %vm85, %v43, 0
  %v99 = vsel %vm85, %v44, 0
  %v102 = vsel %vm85, %v45, 0
  %v105 = vsel %vm85, %v46, 0
  %v108 = vsel %vm85, %v47, 0
  %v111 = vsel %vm85, %v48, 0
  %v114 = vsel %vm85, %v49, 0
  %v117 = vsel %vm85, %v50, 0
  %v120 = vsel %vm85, %v51, 0
  %v123 = vsel %vm85, %v52, 0
  %125 = vmatprep.subr.bf16.mxu0 0
  %126 = vmatpush1.bf16.msra.mxu0 %v77
  %127 = vmatprep.subr.bf16.mxu0 0
  %128 = vmatpush1.bf16.msra.mxu0 %v78
  %129 = vmatprep.subr.bf16.mxu0 0
  %130 = vmatpush1.bf16.msra.mxu0 %v79
  %131 = vmatprep.subr.bf16.mxu0 0
  %132 = vmatpush1.bf16.msra.mxu0 %v80
  %133 = vmatprep.subr.bf16.mxu0 0
  %134 = vmatpush1.bf16.msra.mxu0 0
  %135 = vmatprep.subr.bf16.mxu0 0
  %136 = vmatpush1.bf16.msra.mxu0 0
  %137 = vmatprep.subr.bf16.mxu0 0
  %138 = vmatpush1.bf16.msra.mxu0 0
  %139 = vmatprep.subr.bf16.mxu0 0
  %140 = vmatpush1.bf16.msra.mxu0 0
  %141 = vmatprep.subr.bf16.mxu0 0
  %142 = vmatpush1.bf16.msra.mxu0 0
  %143 = vmatprep.subr.bf16.mxu0 0
  %144 = vmatpush1.bf16.msra.mxu0 0
  %145 = vmatprep.subr.bf16.mxu0 0
  %146 = vmatpush1.bf16.msra.mxu0 0
  %147 = vmatprep.subr.bf16.mxu0 0
  %148 = vmatpush1.bf16.msra.mxu0 0
  %149 = vmatprep.subr.bf16.mxu0 0
  %150 = vmatpush1.bf16.msra.mxu0 0
  %151 = vmatprep.subr.bf16.mxu0 0
  %152 = vmatpush1.bf16.msra.mxu0 0
  %153 = vmatprep.subr.bf16.mxu0 0
  %154 = vmatpush1.bf16.msra.mxu0 0
  %155 = vmatprep.subr.bf16.mxu0 0
  %156 = vmatpush1.bf16.msra.mxu0 0
  %157 = vmatprep.mubr.bf16.mxu0 0
  %158 = vmatmul.mubr.bf16.gmra.mrb[0].mxu0 %v87
  %v159 = vpop.f32.mrb[0].mxu0
  %v160 = vadd.f32 0.0, %v159
  %v161 = vpop.f32.mrb[0].mxu0
  %v162 = vpop.f32.mrb[0].mxu0
  %v163 = vadd.f32 0.0, %v162
  %v164 = vpop.f32.mrb[0].mxu0
  %165 = vmatprep.mubr.bf16.mxu0 0
  %166 = vmatmul.mubr.bf16.gmra.mrb[0].mxu0 %v90
  %v167 = vpop.f32.mrb[0].mxu0
  %v168 = vadd.f32 0.0, %v167
  %v169 = vpop.f32.mrb[0].mxu0
  %v170 = vpop.f32.mrb[0].mxu0
  %v171 = vadd.f32 0.0, %v170
  %v172 = vpop.f32.mrb[0].mxu0
  %173 = vmatprep.mubr.bf16.mxu0 0
  %174 = vmatmul.mubr.bf16.gmra.mrb[0].mxu0 %v93
  %v175 = vpop.f32.mrb[0].mxu0
  %v176 = vadd.f32 0.0, %v175
  %v177 = vpop.f32.mrb[0].mxu0
  %v178 = vpop.f32.mrb[0].mxu0
  %v179 = vadd.f32 0.0, %v178
  %v180 = vpop.f32.mrb[0].mxu0
  %181 = vmatprep.mubr.bf16.mxu0 0
  %182 = vmatmul.mubr.bf16.gmra.mrb[0].mxu0 %v96
  %v183 = vpop.f32.mrb[0].mxu0
  %v184 = vadd.f32 0.0, %v183
  %v185 = vpop.f32.mrb[0].mxu0
  %v186 = vpop.f32.mrb[0].mxu0
  %v187 = vadd.f32 0.0, %v186
  %v188 = vpop.f32.mrb[0].mxu0
  %189 = vmatprep.mubr.bf16.mxu0 0
  %190 = vmatmul.mubr.bf16.gmra.mrb[0].mxu0 %v99
  %v191 = vpop.f32.mrb[0].mxu0
  %v192 = vadd.f32 0.0, %v191
  %v193 = vpop.f32.mrb[0].mxu0
  %v194 = vpop.f32.mrb[0].mxu0
  %v195 = vadd.f32 0.0, %v194
  %v196 = vpop.f32.mrb[0].mxu0
  %197 = vmatprep.mubr.bf16.mxu0 0
  %198 = vmatmul.mubr.bf16.gmra.mrb[0].mxu0 %v102
  %v199 = vpop.f32.mrb[0].mxu0
  %v200 = vadd.f32 0.0, %v199
  %v201 = vpop.f32.mrb[0].mxu0
  %v202 = vpop.f32.mrb[0].mxu0
  %v203 = vadd.f32 0.0, %v202
  %v204 = vpop.f32.mrb[0].mxu0
  %205 = vmatprep.mubr.bf16.mxu0 0
  %206 = vmatmul.mubr.bf16.gmra.mrb[0].mxu0 %v105
  %v207 = vpop.f32.mrb[0].mxu0
  %v208 = vadd.f32 0.0, %v207
  %v209 = vpop.f32.mrb[0].mxu0
  %v210 = vpop.f32.mrb[0].mxu0
  %v211 = vadd.f32 0.0, %v210
  %v212 = vpop.f32.mrb[0].mxu0
  %213 = vmatprep.mubr.bf16.mxu0 0
  %214 = vmatmul.mubr.bf16.gmra.mrb[0].mxu0 %v108
  %v215 = vpop.f32.mrb[0].mxu0
  %v216 = vadd.f32 0.0, %v215
  %v217 = vpop.f32.mrb[0].mxu0
  %v218 = vpop.f32.mrb[0].mxu0
  %v219 = vadd.f32 0.0, %v218
  %v220 = vpop.f32.mrb[0].mxu0
  %221 = vmatprep.mubr.bf16.mxu0 0
  %222 = vmatmul.mubr.bf16.gmra.mrb[0].mxu0 %v111
  %v223 = vpop.f32.mrb[0].mxu0
  %v224 = vadd.f32 0.0, %v223
  %v225 = vpop.f32.mrb[0].mxu0
  %v226 = vpop.f32.mrb[0].mxu0
  %v227 = vadd.f32 0.0, %v226
  %v228 = vpop.f32.mrb[0].mxu0
  %229 = vmatprep.mubr.bf16.mxu0 0
  %230 = vmatmul.mubr.bf16.gmra.mrb[0].mxu0 %v114
  %v231 = vpop.f32.mrb[0].mxu0
  %v232 = vadd.f32 0.0, %v231
  %v233 = vpop.f32.mrb[0].mxu0
  %v234 = vpop.f32.mrb[0].mxu0
  %v235 = vadd.f32 0.0, %v234
  %v236 = vpop.f32.mrb[0].mxu0
  %237 = vmatprep.mubr.bf16.mxu0 0
  %238 = vmatmul.mubr.bf16.gmra.mrb[0].mxu0 %v117
  %v239 = vpop.f32.mrb[0].mxu0
  %v240 = vadd.f32 0.0, %v239
  %v241 = vpop.f32.mrb[0].mxu0
  %v242 = vpop.f32.mrb[0].mxu0
  %v243 = vadd.f32 0.0, %v242
  %v244 = vpop.f32.mrb[0].mxu0
  %245 = vmatprep.mubr.bf16.mxu0 0
  %246 = vmatmul.mubr.bf16.gmra.mrb[0].mxu0 %v120
  %v247 = vpop.f32.mrb[0].mxu0
  %v248 = vadd.f32 0.0, %v247
  %v249 = vpop.f32.mrb[0].mxu0
  %v250 = vpop.f32.mrb[0].mxu0
  %v251 = vadd.f32 0.0, %v250
  %v252 = vpop.f32.mrb[0].mxu0
  %253 = vmatprep.mubr.bf16.mxu0 0
  %254 = vmatmul.mubr.bf16.gmra.mrb[0].mxu0 %v123
  %v255 = vpop.f32.mrb[0].mxu0
  %v256 = vadd.f32 0.0, %v255
  %v257 = vpop.f32.mrb[0].mxu0
  %v258 = vpop.f32.mrb[0].mxu0
  %v259 = vpop.f32.mrb[0].mxu0
  %260 = vdwg.mxu0
  %v261 = vsel %vm85, %v160, 0.0
  %v262 = vsel %vm85, %v163, 0.0
  %v263 = vadd.f32 %v261, %v262
  %v264 = vsel %vm85, %v168, 0.0
  %v265 = vadd.f32 %v263, %v264
  %v266 = vsel %vm85, %v171, 0.0
  %v267 = vadd.f32 %v265, %v266
  %v268 = vsel %vm85, %v176, 0.0
  %v269 = vadd.f32 %v267, %v268
  %v270 = vsel %vm85, %v179, 0.0
  %v271 = vadd.f32 %v269, %v270
  %v272 = vsel %vm85, %v184, 0.0
  %v273 = vadd.f32 %v271, %v272
  %v274 = vsel %vm85, %v187, 0.0
  %v275 = vadd.f32 %v273, %v274
  %v276 = vsel %vm85, %v192, 0.0
  %v277 = vadd.f32 %v275, %v276
  %v278 = vsel %vm85, %v195, 0.0
  %v279 = vadd.f32 %v277, %v278
  %v280 = vsel %vm85, %v200, 0.0
  %v281 = vadd.f32 %v279, %v280
  %v282 = vsel %vm85, %v203, 0.0
  %v283 = vadd.f32 %v281, %v282
  %v284 = vsel %vm85, %v208, 0.0
  %v285 = vadd.f32 %v283, %v284
  %v286 = vsel %vm85, %v211, 0.0
  %v287 = vadd.f32 %v285, %v286
  %v288 = vsel %vm85, %v216, 0.0
  %v289 = vadd.f32 %v287, %v288
  %v290 = vsel %vm85, %v219, 0.0
  %v291 = vadd.f32 %v289, %v290
  %v292 = vsel %vm85, %v224, 0.0
  %v293 = vadd.f32 %v291, %v292
  %v294 = vsel %vm85, %v227, 0.0
  %v295 = vadd.f32 %v293, %v294
  %v296 = vsel %vm85, %v232, 0.0
  %v297 = vadd.f32 %v295, %v296
  %v298 = vsel %vm85, %v235, 0.0
  %v299 = vadd.f32 %v297, %v298
  %v300 = vsel %vm85, %v240, 0.0
  %v301 = vadd.f32 %v299, %v300
  %v302 = vsel %vm85, %v243, 0.0
  %v303 = vadd.f32 %v301, %v302
  %v304 = vsel %vm85, %v248, 0.0
  %v305 = vadd.f32 %v303, %v304
  %v306 = vsel %vm85, %v251, 0.0
  %v307 = vadd.f32 %v305, %v306
  %v308 = vsel %vm85, %v256, 0.0
  %v309 = vadd.f32 %v307, %v308
  %v310 = vrot.slane %v309, 4
  %v311 = vadd.f32 %v309, %v310
  %v312 = vrot.slane %v311, 2
  %v313 = vadd.f32 %v311, %v312
  %v314 = vrot.slane %v313, 1
  %v315 = vadd.f32 %v313, %v314
  %vm316 = vcmask 516096
  %317 = vst.msk [vmem:[%s3] sm:$0x1] %vm316, %v315
  %v318 = vmul.f32 %v160, %v160
  %v319 = vmul.f32 %v163, %v163
  %v320 = vmul.f32 %v168, %v168
  %v321 = vmul.f32 %v171, %v171
  %v322 = vmul.f32 %v176, %v176
  %v323 = vmul.f32 %v179, %v179
  %v324 = vmul.f32 %v184, %v184
  %v325 = vmul.f32 %v187, %v187
  %v326 = vmul.f32 %v192, %v192
  %v327 = vmul.f32 %v195, %v195
  %v328 = vmul.f32 %v200, %v200
  %v329 = vmul.f32 %v203, %v203
  %v330 = vmul.f32 %v208, %v208
  %v331 = vmul.f32 %v211, %v211
  %v332 = vmul.f32 %v216, %v216
  %v333 = vmul.f32 %v219, %v219
  %v334 = vmul.f32 %v224, %v224
  %v335 = vmul.f32 %v227, %v227
  %v336 = vmul.f32 %v232, %v232
  %v337 = vmul.f32 %v235, %v235
  %v338 = vmul.f32 %v240, %v240
  %v339 = vmul.f32 %v243, %v243
  %v340 = vmul.f32 %v248, %v248
  %v341 = vmul.f32 %v251, %v251
  %v342 = vmul.f32 %v256, %v256
  %v343 = vsel %vm85, %v318, 0.0
  %v344 = vsel %vm85, %v319, 0.0
  %v345 = vadd.f32 %v343, %v344
  %v346 = vsel %vm85, %v320, 0.0
  %v347 = vadd.f32 %v345, %v346
  %v348 = vsel %vm85, %v321, 0.0
  %v349 = vadd.f32 %v347, %v348
  %v350 = vsel %vm85, %v322, 0.0
  %v351 = vadd.f32 %v349, %v350
  %v352 = vsel %vm85, %v323, 0.0
  %v353 = vadd.f32 %v351, %v352
  %v354 = vsel %vm85, %v324, 0.0
  %v355 = vadd.f32 %v353, %v354
  %v356 = vsel %vm85, %v325, 0.0
  %v357 = vadd.f32 %v355, %v356
  %v358 = vsel %vm85, %v326, 0.0
  %v359 = vadd.f32 %v357, %v358
  %v360 = vsel %vm85, %v327, 0.0
  %v361 = vadd.f32 %v359, %v360
  %v362 = vsel %vm85, %v328, 0.0
  %v363 = vadd.f32 %v361, %v362
  %v364 = vsel %vm85, %v329, 0.0
  %v365 = vadd.f32 %v363, %v364
  %v366 = vsel %vm85, %v330, 0.0
  %v367 = vadd.f32 %v365, %v366
  %v368 = vsel %vm85, %v331, 0.0
  %v369 = vadd.f32 %v367, %v368
  %v370 = vsel %vm85, %v332, 0.0
  %v371 = vadd.f32 %v369, %v370
  %v372 = vsel %vm85, %v333, 0.0
  %v373 = vadd.f32 %v371, %v372
  %v374 = vsel %vm85, %v334, 0.0
  %v375 = vadd.f32 %v373, %v374
  %v376 = vsel %vm85, %v335, 0.0
  %v377 = vadd.f32 %v375, %v376
  %v378 = vsel %vm85, %v336, 0.0
  %v379 = vadd.f32 %v377, %v378
  %v380 = vsel %vm85, %v337, 0.0
  %v381 = vadd.f32 %v379, %v380
  %v382 = vsel %vm85, %v338, 0.0
  %v383 = vadd.f32 %v381, %v382
  %v384 = vsel %vm85, %v339, 0.0
  %v385 = vadd.f32 %v383, %v384
  %v386 = vsel %vm85, %v340, 0.0
  %v387 = vadd.f32 %v385, %v386
  %v388 = vsel %vm85, %v341, 0.0
  %v389 = vadd.f32 %v387, %v388
  %v390 = vsel %vm85, %v342, 0.0
  %v391 = vadd.f32 %v389, %v390
  %v392 = vrot.slane %v391, 4
  %v393 = vadd.f32 %v391, %v392
  %v394 = vrot.slane %v393, 2
  %v395 = vadd.f32 %v393, %v394
  %v396 = vrot.slane %v395, 1
  %v397 = vadd.f32 %v395, %v396
  %398 = vst.msk [vmem:[%s4] sm:$0x1] %vm316, %v397
  %v399 = vpack.c.bf16 %v163, %v160
  %v400 = vpack.c.bf16 %v171, %v168
  %v401 = vpack.c.bf16 %v179, %v176
  %v402 = vpack.c.bf16 %v187, %v184
  %v403 = vpack.c.bf16 %v195, %v192
  %v404 = vpack.c.bf16 %v203, %v200
  %v405 = vpack.c.bf16 %v211, %v208
  %v406 = vpack.c.bf16 %v219, %v216
  %v407 = vpack.c.bf16 %v227, %v224
  %v408 = vpack.c.bf16 %v235, %v232
  %v409 = vpack.c.bf16 %v243, %v240
  %v410 = vpack.c.bf16 %v251, %v248
  %v411 = vpack.c.bf16 %v256, %v256
  %v425 = vunpack.c.l.b16 %v399
  %v426 = vunpack.c.h.b16 %v399
  %v427 = vunpack.c.l.b16 %v400
  %v428 = vunpack.c.h.b16 %v400
  %v429 = vunpack.c.l.b16 %v401
  %v430 = vunpack.c.h.b16 %v401
  %v431 = vunpack.c.l.b16 %v402
  %v432 = vunpack.c.h.b16 %v402
  %v433 = vunpack.c.l.b16 %v403
  %v434 = vunpack.c.h.b16 %v403
  %v435 = vunpack.c.l.b16 %v404
  %v436 = vunpack.c.h.b16 %v404
  %v437 = vunpack.c.l.b16 %v405
  %v438 = vunpack.c.h.b16 %v405
  %v439 = vunpack.c.l.b16 %v406
  %v440 = vunpack.c.h.b16 %v406
  %v441 = vunpack.c.l.b16 %v407
  %v442 = vunpack.c.h.b16 %v407
  %v443 = vunpack.c.l.b16 %v408
  %v444 = vunpack.c.h.b16 %v408
  %v445 = vunpack.c.l.b16 %v409
  %v446 = vunpack.c.h.b16 %v409
  %v447 = vunpack.c.l.b16 %v410
  %v448 = vunpack.c.h.b16 %v410
  %v449 = vunpack.c.l.b16 %v411
  %v450 = vpack.c.b16 %v425, %v425
  %v451 = vpack.c.b16 %v426, %v426
  %v452 = vpack.c.b16 %v427, %v427
  %v453 = vpack.c.b16 %v428, %v428
  %v454 = vpack.c.b16 %v429, %v429
  %v455 = vpack.c.b16 %v430, %v430
  %v456 = vpack.c.b16 %v431, %v431
  %v457 = vpack.c.b16 %v432, %v432
  %v458 = vpack.c.b16 %v433, %v433
  %v459 = vpack.c.b16 %v434, %v434
  %v460 = vpack.c.b16 %v435, %v435
  %v461 = vpack.c.b16 %v436, %v436
  %v462 = vpack.c.b16 %v437, %v437
  %v463 = vpack.c.b16 %v438, %v438
  %v464 = vpack.c.b16 %v439, %v439
  %v465 = vpack.c.b16 %v440, %v440
  %v466 = vpack.c.b16 %v441, %v441
  %v467 = vpack.c.b16 %v442, %v442
  %v468 = vpack.c.b16 %v443, %v443
  %v469 = vpack.c.b16 %v444, %v444
  %v470 = vpack.c.b16 %v445, %v445
  %v471 = vpack.c.b16 %v446, %v446
  %v472 = vpack.c.b16 %v447, %v447
  %v473 = vpack.c.b16 %v448, %v448
  %v474 = vpack.c.b16 %v449, %v449
  %vm500 = vcmask 519168
  %501 = vst.msk [vmem:[%s2] sm:$0xf] %vm500, %v450
  %502 = vst.msk [vmem:[%s2 + $0x4] sm:$0xf] %vm500, %v451
  %503 = vst.msk [vmem:[%s2 + $0x8] sm:$0xf] %vm500, %v452
  %504 = vst.msk [vmem:[%s2 + $0xc] sm:$0xf] %vm500, %v453
  %505 = vst.msk [vmem:[%s2 + $0x10] sm:$0xf] %vm500, %v454
  %506 = vst.msk [vmem:[%s2 + $0x14] sm:$0xf] %vm500, %v455
  %507 = vst.msk [vmem:[%s2 + $0x18] sm:$0xf] %vm500, %v456
  %508 = vst.msk [vmem:[%s2 + $0x1c] sm:$0xf] %vm500, %v457
  %509 = vst.msk [vmem:[%s2 + $0x20] sm:$0xf] %vm500, %v458
  %510 = vst.msk [vmem:[%s2 + $0x24] sm:$0xf] %vm500, %v459
  %511 = vst.msk [vmem:[%s2 + $0x28] sm:$0xf] %vm500, %v460
  %512 = vst.msk [vmem:[%s2 + $0x2c] sm:$0xf] %vm500, %v461
  %513 = vst.msk [vmem:[%s2 + $0x30] sm:$0xf] %vm500, %v462
  %514 = vst.msk [vmem:[%s2 + $0x34] sm:$0xf] %vm500, %v463
  %515 = vst.msk [vmem:[%s2 + $0x38] sm:$0xf] %vm500, %v464
  %516 = vst.msk [vmem:[%s2 + $0x3c] sm:$0xf] %vm500, %v465
  %517 = vst.msk [vmem:[%s2 + $0x40] sm:$0xf] %vm500, %v466
  %518 = vst.msk [vmem:[%s2 + $0x44] sm:$0xf] %vm500, %v467
  %519 = vst.msk [vmem:[%s2 + $0x48] sm:$0xf] %vm500, %v468
  %520 = vst.msk [vmem:[%s2 + $0x4c] sm:$0xf] %vm500, %v469
  %521 = vst.msk [vmem:[%s2 + $0x50] sm:$0xf] %vm500, %v470
  %522 = vst.msk [vmem:[%s2 + $0x54] sm:$0xf] %vm500, %v471
  %523 = vst.msk [vmem:[%s2 + $0x58] sm:$0xf] %vm500, %v472
  %524 = vst.msk [vmem:[%s2 + $0x5c] sm:$0xf] %vm500, %v473
  %525 = vst.msk [vmem:[%s2 + $0x60] sm:$0xf] %vm500, %v474
  // Predicated region
  $region10: #{_lambda_.4} parent=0 // pred_check
    _
  $region11: #{_lambda_.4} parent=0 // pred_check_branch
    %527 = sbr.rel (0) target = $region13
  $region12: #{_lambda_.4} parent=0 // pred_region
    _
  $region13: #{_lambda_.4} parent=0 // pred_fallthru
    _
  // Predicated region
  $region14: #{_lambda_.4} parent=0 // pred_check
    _
  $region15: #{_lambda_.4} parent=0 // pred_check_branch
    %529 = sbr.rel (0) target = $region17
  $region16: #{_lambda_.4} parent=0 // pred_region
    _
  $region17: #{_lambda_.4} parent=0 // pred_fallthru
    _
  // Predicated region
  $region18: #{_lambda_.4} parent=0 // pred_check
    _
  $region19: #{_lambda_.4} parent=0 // pred_check_branch
    %531 = sbr.rel (0) target = $region21
  $region20: #{_lambda_.4} parent=0 // pred_region
    _
  $region21: #{_lambda_.4} parent=0 // pred_fallthru
    _
  // Predicated region
  $region22: #{_lambda_.4} parent=0 // pred_check
    _
  $region23: #{_lambda_.4} parent=0 // pred_check_branch
    %533 = sbr.rel (0) target = $region25
  $region24: #{_lambda_.4} parent=0 // pred_region
    _
  $region25: #{_lambda_.4} parent=0 // pred_fallthru
    _
  // Predicated region
  $region26: #{_lambda_.4} parent=0 // pred_check
    _
  $region27: #{_lambda_.4} parent=0 // pred_check_branch
    %535 = sbr.rel (0) target = $region29
  $region28: #{_lambda_.4} parent=0 // pred_region
    _
  $region29: #{_lambda_.4} parent=0 // pred_fallthru
    _
  // Predicated region
  $region30: #{_lambda_.4} parent=0 // pred_check
    _
  $region31: #{_lambda_.4} parent=0 // pred_check_branch
    %537 = sbr.rel (0) target = $region33
  $region32: #{_lambda_.4} parent=0 // pred_region
    _
  $region33: #{_lambda_.4} parent=0 // pred_fallthru
    _

// kernel: _lambda_.7
$region0: #{_lambda_.7}
  #allocation0 [shape = 'u32[]', space=smem, size = 0x4, offset = 0x4, fixed_abs, tag = 'smem constant byte address 0x4 - core index']
  #allocation1 [shape = 'u32[144,128]{1,0:T(1,128)}', space=vmem, size = 0x12000, scoped, tag = 'internal scratch']
  %s0 = inlined_call_operand.vmem [shape: bf16[128,256], index: 0, kind: input, shape index: {}]
  %s1 = inlined_call_operand.vmem [shape: f32[1,256], index: 1, kind: input, shape index: {}]
  %s2 = inlined_call_operand.vmem [shape: f32[1,256], index: 2, kind: input, shape index: {}]
  %s3 = inlined_call_operand.hbm [shape: f32[128,256], index: 3, kind: output, shape index: {}]
  %s4 = sld [smem:[#allocation0]]
  $region22: #{_lambda_.7} parent=0
    _
  %s6 = ssub.s32 1, %s4
  %s7 = scalar_select 0, %s6, %s4
  $region1: #{_lambda_.7} parent=0
    #allocation2 [shape = 'u8[131072]{0}', space=vmem, size = 0x20000, scoped, tag = 'output window, operand 0, single buffered']
    #allocation3 [shape = 's32[1]{0}', space=sflag, size = 0x4, scoped, tag = 'scoped memory for _lambda_.7']
    %8 = vsyncpa [#allocation3], 0
    // Predicated region
    $region2: #{_lambda_.7} parent=1 // pred_check
      _
    $region3: #{_lambda_.7} parent=1 // pred_check_branch
      %10 = sbr.rel (0) target = $region5
    $region4: #{_lambda_.7} parent=1 // pred_region
      _
    $region5: #{_lambda_.7} parent=1 // pred_fallthru
      _
    // Predicated region
    $region6: #{_lambda_.7} parent=1 // pred_check
      _
    $region7: #{_lambda_.7} parent=1 // pred_check_branch
      %12 = sbr.rel (0) target = $region9
    $region8: #{_lambda_.7} parent=1 // pred_region
      _
    $region9: #{_lambda_.7} parent=1 // pred_fallthru
      _
    // Predicated region
    $region10: #{_lambda_.7} parent=1 // pred_check
      _
    $region11: #{_lambda_.7} parent=1 // pred_check_branch
      %14 = sbr.rel (0) target = $region13
    $region12: #{_lambda_.7} parent=1 // pred_region
      _
    $region13: #{_lambda_.7} parent=1 // pred_fallthru
      _
    %v15 = vld [vmem:[%s0] sm:$0xff]
    %v16 = vld [vmem:[%s0 + $0x8] sm:$0xff]
    %v17 = vld [vmem:[%s0 + $0x10] sm:$0xff]
    %v18 = vld [vmem:[%s0 + $0x18] sm:$0xff]
    %v19 = vld [vmem:[%s0 + $0x20] sm:$0xff]
    %v20 = vld [vmem:[%s0 + $0x28] sm:$0xff]
    %v21 = vld [vmem:[%s0 + $0x30] sm:$0xff]
    %v22 = vld [vmem:[%s0 + $0x38] sm:$0xff]
    %v23 = vld [vmem:[%s0 + $0x40] sm:$0xff]
    %v24 = vld [vmem:[%s0 + $0x48] sm:$0xff]
    %v25 = vld [vmem:[%s0 + $0x50] sm:$0xff]
    %v26 = vld [vmem:[%s0 + $0x58] sm:$0xff]
    %v27 = vld [vmem:[%s0 + $0x60] sm:$0xff]
    %v28 = vld [vmem:[%s0 + $0x68] sm:$0xff]
    %v29 = vld [vmem:[%s0 + $0x70] sm:$0xff]
    %v30 = vld [vmem:[%s0 + $0x78] sm:$0xff]
    %v31 = vunpack.c.l.bf16 %v15
    %v32 = vunpack.c.h.bf16 %v15
    %v33 = vunpack.c.l.bf16 %v16
    %v34 = vunpack.c.h.bf16 %v16
    %v35 = vunpack.c.l.bf16 %v17
    %v36 = vunpack.c.h.bf16 %v17
    %v37 = vunpack.c.l.bf16 %v18
    %v38 = vunpack.c.h.bf16 %v18
    %v39 = vunpack.c.l.bf16 %v19
    %v40 = vunpack.c.h.bf16 %v19
    %v41 = vunpack.c.l.bf16 %v20
    %v42 = vunpack.c.h.bf16 %v20
    %v43 = vunpack.c.l.bf16 %v21
    %v44 = vunpack.c.h.bf16 %v21
    %v45 = vunpack.c.l.bf16 %v22
    %v46 = vunpack.c.h.bf16 %v22
    %v47 = vunpack.c.l.bf16 %v23
    %v48 = vunpack.c.h.bf16 %v23
    %v49 = vunpack.c.l.bf16 %v24
    %v50 = vunpack.c.h.bf16 %v24
    %v51 = vunpack.c.l.bf16 %v25
    %v52 = vunpack.c.h.bf16 %v25
    %v53 = vunpack.c.l.bf16 %v26
    %v54 = vunpack.c.h.bf16 %v26
    %v55 = vunpack.c.l.bf16 %v27
    %v56 = vunpack.c.h.bf16 %v27
    %v57 = vunpack.c.l.bf16 %v28
    %v58 = vunpack.c.h.bf16 %v28
    %v59 = vunpack.c.l.bf16 %v29
    %v60 = vunpack.c.h.bf16 %v29
    %v61 = vunpack.c.l.bf16 %v30
    %v62 = vunpack.c.h.bf16 %v30
    %v63 = vld [vmem:[%s1] sm:$0x3]
    %v65 = vlaneseq
    %v66 = vshrl.u32 %v65, 7
    %v67 = vsub.s32 0, %v66
    %v68 = vrot.slane %v63, %v67
    %v69 = vlaneseq
    %v70 = vshrl.u32 %v69, 7
    %v71 = vsub.s32 1, %v70
    %v72 = vrot.slane %v63, %v71
    %v75 = vmul.f32 %v31, %v68
    %v76 = vmul.f32 %v32, %v72
    %v77 = vmul.f32 %v33, %v68
    %v78 = vmul.f32 %v34, %v72
    %v79 = vmul.f32 %v35, %v68
    %v80 = vmul.f32 %v36, %v72
    %v81 = vmul.f32 %v37, %v68
    %v82 = vmul.f32 %v38, %v72
    %v83 = vmul.f32 %v39, %v68
    %v84 = vmul.f32 %v40, %v72
    %v85 = vmul.f32 %v41, %v68
    %v86 = vmul.f32 %v42, %v72
    %v87 = vmul.f32 %v43, %v68
    %v88 = vmul.f32 %v44, %v72
    %v89 = vmul.f32 %v45, %v68
    %v90 = vmul.f32 %v46, %v72
    %v91 = vmul.f32 %v47, %v68
    %v92 = vmul.f32 %v48, %v72
    %v93 = vmul.f32 %v49, %v68
    %v94 = vmul.f32 %v50, %v72
    %v95 = vmul.f32 %v51, %v68
    %v96 = vmul.f32 %v52, %v72
    %v97 = vmul.f32 %v53, %v68
    %v98 = vmul.f32 %v54, %v72
    %v99 = vmul.f32 %v55, %v68
    %v100 = vmul.f32 %v56, %v72
    %v101 = vmul.f32 %v57, %v68
    %v102 = vmul.f32 %v58, %v72
    %v103 = vmul.f32 %v59, %v68
    %v104 = vmul.f32 %v60, %v72
    %v105 = vmul.f32 %v61, %v68
    %v106 = vmul.f32 %v62, %v72
    %v107 = vld [vmem:[%s2] sm:$0x3]
    %v109 = vlaneseq
    %v110 = vshrl.u32 %v109, 7
    %v111 = vsub.s32 0, %v110
    %v112 = vrot.slane %v107, %v111
    %v113 = vlaneseq
    %v114 = vshrl.u32 %v113, 7
    %v115 = vsub.s32 1, %v114
    %v116 = vrot.slane %v107, %v115
    %v119 = vadd.f32 %v75, %v112
    %v120 = vadd.f32 %v76, %v116
    %v121 = vadd.f32 %v77, %v112
    %v122 = vadd.f32 %v78, %v116
    %v123 = vadd.f32 %v79, %v112
    %v124 = vadd.f32 %v80, %v116
    %v125 = vadd.f32 %v81, %v112
    %v126 = vadd.f32 %v82, %v116
    %v127 = vadd.f32 %v83, %v112
    %v128 = vadd.f32 %v84, %v116
    %v129 = vadd.f32 %v85, %v112
    %v130 = vadd.f32 %v86, %v116
    %v131 = vadd.f32 %v87, %v112
    %v132 = vadd.f32 %v88, %v116
    %v133 = vadd.f32 %v89, %v112
    %v134 = vadd.f32 %v90, %v116
    %v135 = vadd.f32 %v91, %v112
    %v136 = vadd.f32 %v92, %v116
    %v137 = vadd.f32 %v93, %v112
    %v138 = vadd.f32 %v94, %v116
    %v139 = vadd.f32 %v95, %v112
    %v140 = vadd.f32 %v96, %v116
    %v141 = vadd.f32 %v97, %v112
    %v142 = vadd.f32 %v98, %v116
    %v143 = vadd.f32 %v99, %v112
    %v144 = vadd.f32 %v100, %v116
    %v145 = vadd.f32 %v101, %v112
    %v146 = vadd.f32 %v102, %v116
    %v147 = vadd.f32 %v103, %v112
    %v148 = vadd.f32 %v104, %v116
    %v149 = vadd.f32 %v105, %v112
    %v150 = vadd.f32 %v106, %v116
    %v151 = vmax.f32 %v119, 0.0
    %v152 = vmax.f32 %v120, 0.0
    %v153 = vmax.f32 %v121, 0.0
    %v154 = vmax.f32 %v122, 0.0
    %v155 = vmax.f32 %v123, 0.0
    %v156 = vmax.f32 %v124, 0.0
    %v157 = vmax.f32 %v125, 0.0
    %v158 = vmax.f32 %v126, 0.0
    %v159 = vmax.f32 %v127, 0.0
    %v160 = vmax.f32 %v128, 0.0
    %v161 = vmax.f32 %v129, 0.0
    %v162 = vmax.f32 %v130, 0.0
    %v163 = vmax.f32 %v131, 0.0
    %v164 = vmax.f32 %v132, 0.0
    %v165 = vmax.f32 %v133, 0.0
    %v166 = vmax.f32 %v134, 0.0
    %v167 = vmax.f32 %v135, 0.0
    %v168 = vmax.f32 %v136, 0.0
    %v169 = vmax.f32 %v137, 0.0
    %v170 = vmax.f32 %v138, 0.0
    %v171 = vmax.f32 %v139, 0.0
    %v172 = vmax.f32 %v140, 0.0
    %v173 = vmax.f32 %v141, 0.0
    %v174 = vmax.f32 %v142, 0.0
    %v175 = vmax.f32 %v143, 0.0
    %v176 = vmax.f32 %v144, 0.0
    %v177 = vmax.f32 %v145, 0.0
    %v178 = vmax.f32 %v146, 0.0
    %v179 = vmax.f32 %v147, 0.0
    %v180 = vmax.f32 %v148, 0.0
    %v181 = vmax.f32 %v149, 0.0
    %v182 = vmax.f32 %v150, 0.0
    %183 = vst [vmem:[#allocation2] sm:$0xff] %v151
    %184 = vst [vmem:[#allocation2 + $0x8] sm:$0xff] %v152
    %185 = vst [vmem:[#allocation2 + $0x10] sm:$0xff] %v153
    %186 = vst [vmem:[#allocation2 + $0x18] sm:$0xff] %v154
    %187 = vst [vmem:[#allocation2 + $0x20] sm:$0xff] %v155
    %188 = vst [vmem:[#allocation2 + $0x28] sm:$0xff] %v156
    %189 = vst [vmem:[#allocation2 + $0x30] sm:$0xff] %v157
    %190 = vst [vmem:[#allocation2 + $0x38] sm:$0xff] %v158
    %191 = vst [vmem:[#allocation2 + $0x40] sm:$0xff] %v159
    %192 = vst [vmem:[#allocation2 + $0x48] sm:$0xff] %v160
    %193 = vst [vmem:[#allocation2 + $0x50] sm:$0xff] %v161
    %194 = vst [vmem:[#allocation2 + $0x58] sm:$0xff] %v162
    %195 = vst [vmem:[#allocation2 + $0x60] sm:$0xff] %v163
    %196 = vst [vmem:[#allocation2 + $0x68] sm:$0xff] %v164
    %197 = vst [vmem:[#allocation2 + $0x70] sm:$0xff] %v165
    %198 = vst [vmem:[#allocation2 + $0x78] sm:$0xff] %v166
    %199 = vst [vmem:[#allocation2 + $0x80] sm:$0xff] %v167
    %200 = vst [vmem:[#allocation2 + $0x88] sm:$0xff] %v168
    %201 = vst [vmem:[#allocation2 + $0x90] sm:$0xff] %v169
    %202 = vst [vmem:[#allocation2 + $0x98] sm:$0xff] %v170
    %203 = vst [vmem:[#allocation2 + $0xa0] sm:$0xff] %v171
    %204 = vst [vmem:[#allocation2 + $0xa8] sm:$0xff] %v172
    %205 = vst [vmem:[#allocation2 + $0xb0] sm:$0xff] %v173
    %206 = vst [vmem:[#allocation2 + $0xb8] sm:$0xff] %v174
    %207 = vst [vmem:[#allocation2 + $0xc0] sm:$0xff] %v175
    %208 = vst [vmem:[#allocation2 + $0xc8] sm:$0xff] %v176
    %209 = vst [vmem:[#allocation2 + $0xd0] sm:$0xff] %v177
    %210 = vst [vmem:[#allocation2 + $0xd8] sm:$0xff] %v178
    %211 = vst [vmem:[#allocation2 + $0xe0] sm:$0xff] %v179
    %212 = vst [vmem:[#allocation2 + $0xe8] sm:$0xff] %v180
    %213 = vst [vmem:[#allocation2 + $0xf0] sm:$0xff] %v181
    %214 = vst [vmem:[#allocation2 + $0xf8] sm:$0xff] %v182
    // Predicated region
    $region14: #{_lambda_.7} parent=1 // pred_check
      _
    $region15: #{_lambda_.7} parent=1 // pred_check_branch
      %216 = sbr.rel (0) target = $region17
    $region16: #{_lambda_.7} parent=1 // pred_region
      %s218 = ssub.s32 4096, 4096
      %219 = vsyncadd [#allocation3], %s218
      %s220 = sshll.u32 [#allocation2], 4
      %s221 = int_to_ptr.vmem [resolvable:$true] %s220
      %226 = dma.vmem_to_hbm [thread:$0]  %s221, 4096, %s3, [#allocation3], 256, 256, 16
    $region17: #{_lambda_.7} parent=1 // pred_fallthru
      _
    // Predicated region
    $region18: #{_lambda_.7} parent=1 // pred_check
      _
    $region19: #{_lambda_.7} parent=1 // pred_check_branch
      %228 = sbr.rel (0) target = $region21
    $region20: #{_lambda_.7} parent=1 // pred_region
      %229 = dma.done [#allocation3], 4096
    $region21: #{_lambda_.7} parent=1 // pred_fallthru
      _
    %230 = vsyncpa [#allocation3], 1

// kernel: _lambda_.6
$region0: #{_lambda_.6}
  #allocation0 [shape = 'u32[]', space=smem, size = 0x4, offset = 0x4, fixed_abs, tag = 'smem constant byte address 0x4 - core index']
  #allocation1 [shape = 'u32[144,128]{1,0:T(1,128)}', space=vmem, size = 0x12000, scoped, tag = 'internal scratch']
  %s0 = inlined_call_operand.vmem [shape: bf16[128,64], index: 0, kind: input, shape index: {}]
  %s1 = inlined_call_operand.vmem [shape: f32[1,64], index: 1, kind: input, shape index: {}]
  %s2 = inlined_call_operand.vmem [shape: f32[1,64], index: 2, kind: input, shape index: {}]
  %s3 = inlined_call_operand.vmem [shape: bf16[64,256], index: 3, kind: input, shape index: {}]
  %s4 = inlined_call_operand.vmem [shape: bf16[128,256], index: 4, kind: output, shape index: {0}]
  %s5 = inlined_call_operand.vmem [shape: f32[1,1,256], index: 5, kind: output, shape index: {1}]
  %s6 = inlined_call_operand.vmem [shape: f32[1,1,256], index: 6, kind: output, shape index: {2}]
  %7 = xla_tuple %s4, %s5, %s6
  %s8 = sld [smem:[#allocation0]]
  $region42: #{_lambda_.6} parent=0
    _
  %s10 = ssub.s32 1, %s8
  %s11 = scalar_select 0, %s10, %s8
  // Predicated region
  $region2: #{_lambda_.6} parent=0 // pred_check
    _
  $region3: #{_lambda_.6} parent=0 // pred_check_branch
    %13 = sbr.rel (0) target = $region5
  $region4: #{_lambda_.6} parent=0 // pred_region
    _
  $region5: #{_lambda_.6} parent=0 // pred_fallthru
    _
  // Predicated region
  $region6: #{_lambda_.6} parent=0 // pred_check
    _
  $region7: #{_lambda_.6} parent=0 // pred_check_branch
    %15 = sbr.rel (0) target = $region9
  $region8: #{_lambda_.6} parent=0 // pred_region
    _
  $region9: #{_lambda_.6} parent=0 // pred_fallthru
    _
  // Predicated region
  $region10: #{_lambda_.6} parent=0 // pred_check
    _
  $region11: #{_lambda_.6} parent=0 // pred_check_branch
    %17 = sbr.rel (0) target = $region13
  $region12: #{_lambda_.6} parent=0 // pred_region
    _
  $region13: #{_lambda_.6} parent=0 // pred_fallthru
    _
  // Predicated region
  $region14: #{_lambda_.6} parent=0 // pred_check
    _
  $region15: #{_lambda_.6} parent=0 // pred_check_branch
    %19 = sbr.rel (0) target = $region17
  $region16: #{_lambda_.6} parent=0 // pred_region
    _
  $region17: #{_lambda_.6} parent=0 // pred_fallthru
    _
  %v21 = vld [vmem:[%s0] sm:$0xf]
  %v22 = vld [vmem:[%s0 + $0x4] sm:$0xf]
  %v23 = vld [vmem:[%s0 + $0x8] sm:$0xf]
  %v24 = vld [vmem:[%s0 + $0xc] sm:$0xf]
  %v25 = vld [vmem:[%s0 + $0x10] sm:$0xf]
  %v26 = vld [vmem:[%s0 + $0x14] sm:$0xf]
  %v27 = vld [vmem:[%s0 + $0x18] sm:$0xf]
  %v28 = vld [vmem:[%s0 + $0x1c] sm:$0xf]
  %v29 = vld [vmem:[%s0 + $0x20] sm:$0xf]
  %v30 = vld [vmem:[%s0 + $0x24] sm:$0xf]
  %v31 = vld [vmem:[%s0 + $0x28] sm:$0xf]
  %v32 = vld [vmem:[%s0 + $0x2c] sm:$0xf]
  %v33 = vld [vmem:[%s0 + $0x30] sm:$0xf]
  %v34 = vld [vmem:[%s0 + $0x34] sm:$0xf]
  %v35 = vld [vmem:[%s0 + $0x38] sm:$0xf]
  %v36 = vld [vmem:[%s0 + $0x3c] sm:$0xf]
  %v37 = vunpack.c.l.bf16 %v21
  %v38 = vunpack.c.l.bf16 %v22
  %v39 = vunpack.c.l.bf16 %v23
  %v40 = vunpack.c.l.bf16 %v24
  %v41 = vunpack.c.l.bf16 %v25
  %v42 = vunpack.c.l.bf16 %v26
  %v43 = vunpack.c.l.bf16 %v27
  %v44 = vunpack.c.l.bf16 %v28
  %v45 = vunpack.c.l.bf16 %v29
  %v46 = vunpack.c.l.bf16 %v30
  %v47 = vunpack.c.l.bf16 %v31
  %v48 = vunpack.c.l.bf16 %v32
  %v49 = vunpack.c.l.bf16 %v33
  %v50 = vunpack.c.l.bf16 %v34
  %v51 = vunpack.c.l.bf16 %v35
  %v52 = vunpack.c.l.bf16 %v36
  %v53 = vld [vmem:[%s1] sm:$0x1]
  %v55 = vlaneseq
  %v56 = vshrl.u32 %v55, 7
  %v57 = vsub.s32 0, %v56
  %v58 = vrot.slane %v53, %v57
  %v60 = vmul.f32 %v37, %v58
  %v61 = vmul.f32 %v38, %v58
  %v62 = vmul.f32 %v39, %v58
  %v63 = vmul.f32 %v40, %v58
  %v64 = vmul.f32 %v41, %v58
  %v65 = vmul.f32 %v42, %v58
  %v66 = vmul.f32 %v43, %v58
  %v67 = vmul.f32 %v44, %v58
  %v68 = vmul.f32 %v45, %v58
  %v69 = vmul.f32 %v46, %v58
  %v70 = vmul.f32 %v47, %v58
  %v71 = vmul.f32 %v48, %v58
  %v72 = vmul.f32 %v49, %v58
  %v73 = vmul.f32 %v50, %v58
  %v74 = vmul.f32 %v51, %v58
  %v75 = vmul.f32 %v52, %v58
  %v76 = vld [vmem:[%s2] sm:$0x1]
  %v78 = vlaneseq
  %v79 = vshrl.u32 %v78, 7
  %v80 = vsub.s32 0, %v79
  %v81 = vrot.slane %v76, %v80
  %v83 = vadd.f32 %v60, %v81
  %v84 = vadd.f32 %v61, %v81
  %v85 = vadd.f32 %v62, %v81
  %v86 = vadd.f32 %v63, %v81
  %v87 = vadd.f32 %v64, %v81
  %v88 = vadd.f32 %v65, %v81
  %v89 = vadd.f32 %v66, %v81
  %v90 = vadd.f32 %v67, %v81
  %v91 = vadd.f32 %v68, %v81
  %v92 = vadd.f32 %v69, %v81
  %v93 = vadd.f32 %v70, %v81
  %v94 = vadd.f32 %v71, %v81
  %v95 = vadd.f32 %v72, %v81
  %v96 = vadd.f32 %v73, %v81
  %v97 = vadd.f32 %v74, %v81
  %v98 = vadd.f32 %v75, %v81
  %v99 = vmax.f32 %v83, 0.0
  %v100 = vmax.f32 %v84, 0.0
  %v101 = vmax.f32 %v85, 0.0
  %v102 = vmax.f32 %v86, 0.0
  %v103 = vmax.f32 %v87, 0.0
  %v104 = vmax.f32 %v88, 0.0
  %v105 = vmax.f32 %v89, 0.0
  %v106 = vmax.f32 %v90, 0.0
  %v107 = vmax.f32 %v91, 0.0
  %v108 = vmax.f32 %v92, 0.0
  %v109 = vmax.f32 %v93, 0.0
  %v110 = vmax.f32 %v94, 0.0
  %v111 = vmax.f32 %v95, 0.0
  %v112 = vmax.f32 %v96, 0.0
  %v113 = vmax.f32 %v97, 0.0
  %v114 = vmax.f32 %v98, 0.0
  %v115 = vpack.c.bf16 %v100, %v99
  %v116 = vpack.c.bf16 %v102, %v101
  %v117 = vpack.c.bf16 %v104, %v103
  %v118 = vpack.c.bf16 %v106, %v105
  %v119 = vpack.c.bf16 %v108, %v107
  %v120 = vpack.c.bf16 %v110, %v109
  %v121 = vpack.c.bf16 %v112, %v111
  %v122 = vpack.c.bf16 %v114, %v113
  %v123 = vld [vmem:[%s3] sm:$0xff]
  %v124 = vld [vmem:[%s3 + $0x8] sm:$0xff]
  %v125 = vld [vmem:[%s3 + $0x10] sm:$0xff]
  %v126 = vld [vmem:[%s3 + $0x18] sm:$0xff]
  %v127 = vld [vmem:[%s3 + $0x20] sm:$0xff]
  %v128 = vld [vmem:[%s3 + $0x28] sm:$0xff]
  %v129 = vld [vmem:[%s3 + $0x30] sm:$0xff]
  %v130 = vld [vmem:[%s3 + $0x38] sm:$0xff]
  %v139 = vunpack.c.l.b16 %v123
  %v140 = vunpack.c.h.b16 %v123
  %v141 = vunpack.c.l.b16 %v124
  %v142 = vunpack.c.h.b16 %v124
  %v143 = vunpack.c.l.b16 %v125
  %v144 = vunpack.c.h.b16 %v125
  %v145 = vunpack.c.l.b16 %v126
  %v146 = vunpack.c.h.b16 %v126
  %v147 = vunpack.c.l.b16 %v127
  %v148 = vunpack.c.h.b16 %v127
  %v149 = vunpack.c.l.b16 %v128
  %v150 = vunpack.c.h.b16 %v128
  %v151 = vunpack.c.l.b16 %v129
  %v152 = vunpack.c.h.b16 %v129
  %v153 = vunpack.c.l.b16 %v130
  %v154 = vunpack.c.h.b16 %v130
  %v155 = vpack.c.b16 %v141, %v139
  %v156 = vpack.c.b16 %v142, %v140
  %v157 = vpack.c.b16 %v145, %v143
  %v158 = vpack.c.b16 %v146, %v144
  %v159 = vpack.c.b16 %v149, %v147
  %v160 = vpack.c.b16 %v150, %v148
  %v161 = vpack.c.b16 %v153, %v151
  %v162 = vpack.c.b16 %v154, %v152
  %vm171 = vcmask 523264
  %v173 = vsel %vm171, %v115, 0
  %v176 = vsel %vm171, %v116, 0
  %v179 = vsel %vm171, %v117, 0
  %v182 = vsel %vm171, %v118, 0
  %v185 = vsel %vm171, %v119, 0
  %v188 = vsel %vm171, %v120, 0
  %v191 = vsel %vm171, %v121, 0
  %v194 = vsel %vm171, %v122, 0
  %196 = vmatprep.subr.bf16.mxu0 %v156
  %197 = vmatpush1.bf16.msra.mxu0 %v155
  %198 = vmatprep.subr.bf16.mxu0 %v158
  %199 = vmatpush1.bf16.msra.mxu0 %v157
  %200 = vmatprep.subr.bf16.mxu0 %v160
  %201 = vmatpush1.bf16.msra.mxu0 %v159
  %202 = vmatprep.subr.bf16.mxu0 %v162
  %203 = vmatpush1.bf16.msra.mxu0 %v161
  %204 = vmatprep.subr.bf16.mxu0 0
  %205 = vmatpush1.bf16.msra.mxu0 0
  %206 = vmatprep.subr.bf16.mxu0 0
  %207 = vmatpush1.bf16.msra.mxu0 0
  %208 = vmatprep.subr.bf16.mxu0 0
  %209 = vmatpush1.bf16.msra.mxu0 0
  %210 = vmatprep.subr.bf16.mxu0 0
  %211 = vmatpush1.bf16.msra.mxu0 0
  %212 = vmatprep.subr.bf16.mxu0 0
  %213 = vmatpush1.bf16.msra.mxu0 0
  %214 = vmatprep.subr.bf16.mxu0 0
  %215 = vmatpush1.bf16.msra.mxu0 0
  %216 = vmatprep.subr.bf16.mxu0 0
  %217 = vmatpush1.bf16.msra.mxu0 0
  %218 = vmatprep.subr.bf16.mxu0 0
  %219 = vmatpush1.bf16.msra.mxu0 0
  %220 = vmatprep.subr.bf16.mxu0 0
  %221 = vmatpush1.bf16.msra.mxu0 0
  %222 = vmatprep.subr.bf16.mxu0 0
  %223 = vmatpush1.bf16.msra.mxu0 0
  %224 = vmatprep.subr.bf16.mxu0 0
  %225 = vmatpush1.bf16.msra.mxu0 0
  %226 = vmatprep.subr.bf16.mxu0 0
  %227 = vmatpush1.bf16.msra.mxu0 0
  %228 = vmatprep.mubr.bf16.mxu0 0
  %229 = vmatmul.mubr.bf16.gmra.mrb[0].mxu0 %v173
  %v230 = vpop.f32.mrb[0].mxu0
  %v231 = vadd.f32 0.0, %v230
  %v232 = vpop.f32.mrb[0].mxu0
  %v233 = vadd.f32 0.0, %v232
  %v234 = vpop.f32.mrb[0].mxu0
  %v235 = vadd.f32 0.0, %v234
  %v236 = vpop.f32.mrb[0].mxu0
  %v237 = vadd.f32 0.0, %v236
  %238 = vmatprep.mubr.bf16.mxu0 0
  %239 = vmatmul.mubr.bf16.gmra.mrb[0].mxu0 %v176
  %v240 = vpop.f32.mrb[0].mxu0
  %v241 = vadd.f32 0.0, %v240
  %v242 = vpop.f32.mrb[0].mxu0
  %v243 = vadd.f32 0.0, %v242
  %v244 = vpop.f32.mrb[0].mxu0
  %v245 = vadd.f32 0.0, %v244
  %v246 = vpop.f32.mrb[0].mxu0
  %v247 = vadd.f32 0.0, %v246
  %248 = vmatprep.mubr.bf16.mxu0 0
  %249 = vmatmul.mubr.bf16.gmra.mrb[0].mxu0 %v179
  %v250 = vpop.f32.mrb[0].mxu0
  %v251 = vadd.f32 0.0, %v250
  %v252 = vpop.f32.mrb[0].mxu0
  %v253 = vadd.f32 0.0, %v252
  %v254 = vpop.f32.mrb[0].mxu0
  %v255 = vadd.f32 0.0, %v254
  %v256 = vpop.f32.mrb[0].mxu0
  %v257 = vadd.f32 0.0, %v256
  %258 = vmatprep.mubr.bf16.mxu0 0
  %259 = vmatmul.mubr.bf16.gmra.mrb[0].mxu0 %v182
  %v260 = vpop.f32.mrb[0].mxu0
  %v261 = vadd.f32 0.0, %v260
  %v262 = vpop.f32.mrb[0].mxu0
  %v263 = vadd.f32 0.0, %v262
  %v264 = vpop.f32.mrb[0].mxu0
  %v265 = vadd.f32 0.0, %v264
  %v266 = vpop.f32.mrb[0].mxu0
  %v267 = vadd.f32 0.0, %v266
  %268 = vmatprep.mubr.bf16.mxu0 0
  %269 = vmatmul.mubr.bf16.gmra.mrb[0].mxu0 %v185
  %v270 = vpop.f32.mrb[0].mxu0
  %v271 = vadd.f32 0.0, %v270
  %v272 = vpop.f32.mrb[0].mxu0
  %v273 = vadd.f32 0.0, %v272
  %v274 = vpop.f32.mrb[0].mxu0
  %v275 = vadd.f32 0.0, %v274
  %v276 = vpop.f32.mrb[0].mxu0
  %v277 = vadd.f32 0.0, %v276
  %278 = vmatprep.mubr.bf16.mxu0 0
  %279 = vmatmul.mubr.bf16.gmra.mrb[0].mxu0 %v188
  %v280 = vpop.f32.mrb[0].mxu0
  %v281 = vadd.f32 0.0, %v280
  %v282 = vpop.f32.mrb[0].mxu0
  %v283 = vadd.f32 0.0, %v282
  %v284 = vpop.f32.mrb[0].mxu0
  %v285 = vadd.f32 0.0, %v284
  %v286 = vpop.f32.mrb[0].mxu0
  %v287 = vadd.f32 0.0, %v286
  %288 = vmatprep.mubr.bf16.mxu0 0
  %289 = vmatmul.mubr.bf16.gmra.mrb[0].mxu0 %v191
  %v290 = vpop.f32.mrb[0].mxu0
  %v291 = vadd.f32 0.0, %v290
  %v292 = vpop.f32.mrb[0].mxu0
  %v293 = vadd.f32 0.0, %v292
  %v294 = vpop.f32.mrb[0].mxu0
  %v295 = vadd.f32 0.0, %v294
  %v296 = vpop.f32.mrb[0].mxu0
  %v297 = vadd.f32 0.0, %v296
  %298 = vmatprep.mubr.bf16.mxu0 0
  %299 = vmatmul.mubr.bf16.gmra.mrb[0].mxu0 %v194
  %v300 = vpop.f32.mrb[0].mxu0
  %v301 = vadd.f32 0.0, %v300
  %v302 = vpop.f32.mrb[0].mxu0
  %v303 = vadd.f32 0.0, %v302
  %v304 = vpop.f32.mrb[0].mxu0
  %v305 = vadd.f32 0.0, %v304
  %v306 = vpop.f32.mrb[0].mxu0
  %v307 = vadd.f32 0.0, %v306
  %308 = vdwg.mxu0
  %v309 = vadd.f32 %v231, %v235
  %v310 = vadd.f32 %v309, %v241
  %v311 = vadd.f32 %v310, %v245
  %v312 = vadd.f32 %v311, %v251
  %v313 = vadd.f32 %v312, %v255
  %v314 = vadd.f32 %v313, %v261
  %v315 = vadd.f32 %v314, %v265
  %v316 = vadd.f32 %v315, %v271
  %v317 = vadd.f32 %v316, %v275
  %v318 = vadd.f32 %v317, %v281
  %v319 = vadd.f32 %v318, %v285
  %v320 = vadd.f32 %v319, %v291
  %v321 = vadd.f32 %v320, %v295
  %v322 = vadd.f32 %v321, %v301
  %v323 = vadd.f32 %v322, %v305
  %v324 = vrot.slane %v323, 4
  %v325 = vadd.f32 %v323, %v324
  %v326 = vrot.slane %v325, 2
  %v327 = vadd.f32 %v325, %v326
  %v328 = vrot.slane %v327, 1
  %v329 = vadd.f32 %v327, %v328
  %v330 = vadd.f32 %v233, %v237
  %v331 = vadd.f32 %v330, %v243
  %v332 = vadd.f32 %v331, %v247
  %v333 = vadd.f32 %v332, %v253
  %v334 = vadd.f32 %v333, %v257
  %v335 = vadd.f32 %v334, %v263
  %v336 = vadd.f32 %v335, %v267
  %v337 = vadd.f32 %v336, %v273
  %v338 = vadd.f32 %v337, %v277
  %v339 = vadd.f32 %v338, %v283
  %v340 = vadd.f32 %v339, %v287
  %v341 = vadd.f32 %v340, %v293
  %v342 = vadd.f32 %v341, %v297
  %v343 = vadd.f32 %v342, %v303
  %v344 = vadd.f32 %v343, %v307
  %v345 = vrot.slane %v344, 4
  %v346 = vadd.f32 %v344, %v345
  %v347 = vrot.slane %v346, 2
  %v348 = vadd.f32 %v346, %v347
  %v349 = vrot.slane %v348, 1
  %v350 = vadd.f32 %v348, %v349
  %v353 = vcombine.low %v329, %v350
  %v355 = vunpack.c.l.s4 1966171168
  %v356 = vunpack.c.0.s8 %v355
  %v357 = vlaneseq
  %v358 = vshrl.u32 %v357, 7
  %v359 = vsub.s32 %v356, %v358
  %v360 = vrot.slane %v353, %v359
  %v362 = vunpack.c.l.s4 1966171168
  %v363 = vunpack.c.0.s8 %v362
  %v364 = vlaneseq
  %v365 = vshrl.u32 %v364, 7
  %v366 = vsub.s32 %v363, %v365
  %v367 = vrot.slane %v360, %v366
  %v369 = vlaneseq
  %vm370 = vcmp.ge.s32.totalorder %v369, 0
  %vm371 = vcmp.lt.s32.totalorder %v369, 256
  %vm372 = vmand %vm370, %vm371
  %373 = vst.msk [vmem:[%s5] sm:$0x3] %vm372, %v367
  %v374 = vmul.f32 %v231, %v231
  %v375 = vmul.f32 %v233, %v233
  %v376 = vmul.f32 %v235, %v235
  %v377 = vmul.f32 %v237, %v237
  %v378 = vmul.f32 %v241, %v241
  %v379 = vmul.f32 %v243, %v243
  %v380 = vmul.f32 %v245, %v245
  %v381 = vmul.f32 %v247, %v247
  %v382 = vmul.f32 %v251, %v251
  %v383 = vmul.f32 %v253, %v253
  %v384 = vmul.f32 %v255, %v255
  %v385 = vmul.f32 %v257, %v257
  %v386 = vmul.f32 %v261, %v261
  %v387 = vmul.f32 %v263, %v263
  %v388 = vmul.f32 %v265, %v265
  %v389 = vmul.f32 %v267, %v267
  %v390 = vmul.f32 %v271, %v271
  %v391 = vmul.f32 %v273, %v273
  %v392 = vmul.f32 %v275, %v275
  %v393 = vmul.f32 %v277, %v277
  %v394 = vmul.f32 %v281, %v281
  %v395 = vmul.f32 %v283, %v283
  %v396 = vmul.f32 %v285, %v285
  %v397 = vmul.f32 %v287, %v287
  %v398 = vmul.f32 %v291, %v291
  %v399 = vmul.f32 %v293, %v293
  %v400 = vmul.f32 %v295, %v295
  %v401 = vmul.f32 %v297, %v297
  %v402 = vmul.f32 %v301, %v301
  %v403 = vmul.f32 %v303, %v303
  %v404 = vmul.f32 %v305, %v305
  %v405 = vmul.f32 %v307, %v307
  %v406 = vadd.f32 %v374, %v376
  %v407 = vadd.f32 %v406, %v378
  %v408 = vadd.f32 %v407, %v380
  %v409 = vadd.f32 %v408, %v382
  %v410 = vadd.f32 %v409, %v384
  %v411 = vadd.f32 %v410, %v386
  %v412 = vadd.f32 %v411, %v388
  %v413 = vadd.f32 %v412, %v390
  %v414 = vadd.f32 %v413, %v392
  %v415 = vadd.f32 %v414, %v394
  %v416 = vadd.f32 %v415, %v396
  %v417 = vadd.f32 %v416, %v398
  %v418 = vadd.f32 %v417, %v400
  %v419 = vadd.f32 %v418, %v402
  %v420 = vadd.f32 %v419, %v404
  %v421 = vrot.slane %v420, 4
  %v422 = vadd.f32 %v420, %v421
  %v423 = vrot.slane %v422, 2
  %v424 = vadd.f32 %v422, %v423
  %v425 = vrot.slane %v424, 1
  %v426 = vadd.f32 %v424, %v425
  %v427 = vadd.f32 %v375, %v377
  %v428 = vadd.f32 %v427, %v379
  %v429 = vadd.f32 %v428, %v381
  %v430 = vadd.f32 %v429, %v383
  %v431 = vadd.f32 %v430, %v385
  %v432 = vadd.f32 %v431, %v387
  %v433 = vadd.f32 %v432, %v389
  %v434 = vadd.f32 %v433, %v391
  %v435 = vadd.f32 %v434, %v393
  %v436 = vadd.f32 %v435, %v395
  %v437 = vadd.f32 %v436, %v397
  %v438 = vadd.f32 %v437, %v399
  %v439 = vadd.f32 %v438, %v401
  %v440 = vadd.f32 %v439, %v403
  %v441 = vadd.f32 %v440, %v405
  %v442 = vrot.slane %v441, 4
  %v443 = vadd.f32 %v441, %v442
  %v444 = vrot.slane %v443, 2
  %v445 = vadd.f32 %v443, %v444
  %v446 = vrot.slane %v445, 1
  %v447 = vadd.f32 %v445, %v446
  %v450 = vcombine.low %v426, %v447
  %v452 = vunpack.c.l.s4 1966171168
  %v453 = vunpack.c.0.s8 %v452
  %v454 = vlaneseq
  %v455 = vshrl.u32 %v454, 7
  %v456 = vsub.s32 %v453, %v455
  %v457 = vrot.slane %v450, %v456
  %v459 = vunpack.c.l.s4 1966171168
  %v460 = vunpack.c.0.s8 %v459
  %v461 = vlaneseq
  %v462 = vshrl.u32 %v461, 7
  %v463 = vsub.s32 %v460, %v462
  %v464 = vrot.slane %v457, %v463
  %466 = vst.msk [vmem:[%s6] sm:$0x3] %vm372, %v464
  %v467 = vpack.c.bf16 %v235, %v231
  %v468 = vpack.c.bf16 %v237, %v233
  %v469 = vpack.c.bf16 %v245, %v241
  %v470 = vpack.c.bf16 %v247, %v243
  %v471 = vpack.c.bf16 %v255, %v251
  %v472 = vpack.c.bf16 %v257, %v253
  %v473 = vpack.c.bf16 %v265, %v261
  %v474 = vpack.c.bf16 %v267, %v263
  %v475 = vpack.c.bf16 %v275, %v271
  %v476 = vpack.c.bf16 %v277, %v273
  %v477 = vpack.c.bf16 %v285, %v281
  %v478 = vpack.c.bf16 %v287, %v283
  %v479 = vpack.c.bf16 %v295, %v291
  %v480 = vpack.c.bf16 %v297, %v293
  %v481 = vpack.c.bf16 %v305, %v301
  %v482 = vpack.c.bf16 %v307, %v303
  %v499 = vunpack.c.l.b16 %v467
  %v500 = vunpack.c.l.b16 %v468
  %v501 = vunpack.c.h.b16 %v467
  %v502 = vunpack.c.h.b16 %v468
  %v503 = vunpack.c.l.b16 %v469
  %v504 = vunpack.c.l.b16 %v470
  %v505 = vunpack.c.h.b16 %v469
  %v506 = vunpack.c.h.b16 %v470
  %v507 = vunpack.c.l.b16 %v471
  %v508 = vunpack.c.l.b16 %v472
  %v509 = vunpack.c.h.b16 %v471
  %v510 = vunpack.c.h.b16 %v472
  %v511 = vunpack.c.l.b16 %v473
  %v512 = vunpack.c.l.b16 %v474
  %v513 = vunpack.c.h.b16 %v473
  %v514 = vunpack.c.h.b16 %v474
  %v515 = vunpack.c.l.b16 %v475
  %v516 = vunpack.c.l.b16 %v476
  %v517 = vunpack.c.h.b16 %v475
  %v518 = vunpack.c.h.b16 %v476
  %v519 = vunpack.c.l.b16 %v477
  %v520 = vunpack.c.l.b16 %v478
  %v521 = vunpack.c.h.b16 %v477
  %v522 = vunpack.c.h.b16 %v478
  %v523 = vunpack.c.l.b16 %v479
  %v524 = vunpack.c.l.b16 %v480
  %v525 = vunpack.c.h.b16 %v479
  %v526 = vunpack.c.h.b16 %v480
  %v527 = vunpack.c.l.b16 %v481
  %v528 = vunpack.c.l.b16 %v482
  %v529 = vunpack.c.h.b16 %v481
  %v530 = vunpack.c.h.b16 %v482
  %v531 = vpack.c.b16 %v500, %v499
  %v532 = vpack.c.b16 %v502, %v501
  %v533 = vpack.c.b16 %v504, %v503
  %v534 = vpack.c.b16 %v506, %v505
  %v535 = vpack.c.b16 %v508, %v507
  %v536 = vpack.c.b16 %v510, %v509
  %v537 = vpack.c.b16 %v512, %v511
  %v538 = vpack.c.b16 %v514, %v513
  %v539 = vpack.c.b16 %v516, %v515
  %v540 = vpack.c.b16 %v518, %v517
  %v541 = vpack.c.b16 %v520, %v519
  %v542 = vpack.c.b16 %v522, %v521
  %v543 = vpack.c.b16 %v524, %v523
  %v544 = vpack.c.b16 %v526, %v525
  %v545 = vpack.c.b16 %v528, %v527
  %v546 = vpack.c.b16 %v530, %v529
  %563 = vst [vmem:[%s4] sm:$0xff] %v531
  %564 = vst [vmem:[%s4 + $0x8] sm:$0xff] %v532
  %565 = vst [vmem:[%s4 + $0x10] sm:$0xff] %v533
  %566 = vst [vmem:[%s4 + $0x18] sm:$0xff] %v534
  %567 = vst [vmem:[%s4 + $0x20] sm:$0xff] %v535
  %568 = vst [vmem:[%s4 + $0x28] sm:$0xff] %v536
  %569 = vst [vmem:[%s4 + $0x30] sm:$0xff] %v537
  %570 = vst [vmem:[%s4 + $0x38] sm:$0xff] %v538
  %571 = vst [vmem:[%s4 + $0x40] sm:$0xff] %v539
  %572 = vst [vmem:[%s4 + $0x48] sm:$0xff] %v540
  %573 = vst [vmem:[%s4 + $0x50] sm:$0xff] %v541
  %574 = vst [vmem:[%s4 + $0x58] sm:$0xff] %v542
  %575 = vst [vmem:[%s4 + $0x60] sm:$0xff] %v543
  %576 = vst [vmem:[%s4 + $0x68] sm:$0xff] %v544
  %577 = vst [vmem:[%s4 + $0x70] sm:$0xff] %v545
  %578 = vst [vmem:[%s4 + $0x78] sm:$0xff] %v546
  // Predicated region
  $region18: #{_lambda_.6} parent=0 // pred_check
    _
  $region19: #{_lambda_.6} parent=0 // pred_check_branch
    %580 = sbr.rel (0) target = $region21
  $region20: #{_lambda_.6} parent=0 // pred_region
    _
  $region21: #{_lambda_.6} parent=0 // pred_fallthru
    _
  // Predicated region
  $region22: #{_lambda_.6} parent=0 // pred_check
    _
  $region23: #{_lambda_.6} parent=0 // pred_check_branch
    %582 = sbr.rel (0) target = $region25
  $region24: #{_lambda_.6} parent=0 // pred_region
    _
  $region25: #{_lambda_.6} parent=0 // pred_fallthru
    _
  // Predicated region
  $region26: #{_lambda_.6} parent=0 // pred_check
    _
  $region27: #{_lambda_.6} parent=0 // pred_check_branch
    %584 = sbr.rel (0) target = $region29
  $region28: #{_lambda_.6} parent=0 // pred_region
    _
  $region29: #{_lambda_.6} parent=0 // pred_fallthru
    _
  // Predicated region
  $region30: #{_lambda_.6} parent=0 // pred_check
    _
  $region31: #{_lambda_.6} parent=0 // pred_check_branch
    %586 = sbr.rel (0) target = $region33
  $region32: #{_lambda_.6} parent=0 // pred_region
    _
  $region33: #{_lambda_.6} parent=0 // pred_fallthru
    _
  // Predicated region
  $region34: #{_lambda_.6} parent=0 // pred_check
    _
  $region35: #{_lambda_.6} parent=0 // pred_check_branch
    %588 = sbr.rel (0) target = $region37
  $region36: #{_lambda_.6} parent=0 // pred_region
    _
  $region37: #{_lambda_.6} parent=0 // pred_fallthru
    _
  // Predicated region
  $region38: #{_lambda_.6} parent=0 // pred_check
    _
  $region39: #{_lambda_.6} parent=0 // pred_check_branch
    %590 = sbr.rel (0) target = $region41
  $region40: #{_lambda_.6} parent=0 // pred_region
    _
  $region41: #{_lambda_.6} parent=0 // pred_fallthru
    _

// kernel: _lambda_.5
$region0: #{_lambda_.5}
  #allocation0 [shape = 'u32[]', space=smem, size = 0x4, offset = 0x4, fixed_abs, tag = 'smem constant byte address 0x4 - core index']
  #allocation1 [shape = 'u32[144,128]{1,0:T(1,128)}', space=vmem, size = 0x12000, scoped, tag = 'internal scratch']
  %s0 = inlined_call_operand.vmem [shape: bf16[2,10,10,64], index: 0, kind: input, shape index: {}]
  %s1 = inlined_call_operand.vmem [shape: f32[1,64], index: 1, kind: input, shape index: {}]
  %s2 = inlined_call_operand.vmem [shape: f32[1,64], index: 2, kind: input, shape index: {}]
  %s3 = inlined_call_operand.vmem [shape: bf16[576,64], index: 3, kind: input, shape index: {}]
  %s4 = inlined_call_operand.vmem [shape: bf16[2,8,8,64], index: 4, kind: output, shape index: {0}]
  %s5 = inlined_call_operand.vmem [shape: f32[2,1,64], index: 5, kind: output, shape index: {1}]
  %s6 = inlined_call_operand.vmem [shape: f32[2,1,64], index: 6, kind: output, shape index: {2}]
  %7 = xla_tuple %s4, %s5, %s6
  %s8 = sld [smem:[#allocation0]]
  $region65: #{_lambda_.5} parent=0
    _
  %s10 = ssub.s32 1, %s8
  %s11 = scalar_select 0, %s10, %s8
  loop: start=0, step=1, limit=4
  $region2: #{_lambda_.5} parent=0 // loop_pre_header
    _
  $region3: #{_lambda_.5} parent=0 // loop_header
    %s13 = sphi 0, %s17
    %p14 = scmp.ge.s32.totalorder %s13, 4
    %s23 = sphi 0, %s25
    %s26 = sphi 0, %s23
    %s27 = sphi 0, %s26
    %s43 = sphi 0, %s27
    %s47 = sphi 0, %s47
    %s49 = sphi 0, %s47
    %s50 = sphi 0, %s49
    %s64 = sphi 0, %s50
    %s68 = sphi 0, %s68
    %s70 = sphi 0, %s68
    %s71 = sphi 0, %s70
    %s85 = sphi 0, %s71
    %s89 = sphi 0, %s89
    %s91 = sphi 0, %s89
    %s92 = sphi 0, %s91
    %s106 = sphi 0, %s92
    %s112 = sphi 0, %s114
    %s115 = sphi 0, %s112
    %s116 = sphi 0, %s115
    %s132 = sphi 0, %s116
    %s138 = sphi 0, %s140
    %s141 = sphi 0, %s138
    %s142 = sphi 0, %s141
    %s158 = sphi 0, %s142
    %s164 = sphi 0, %s166
    %s167 = sphi 0, %s164
    %s168 = sphi 0, %s167
    %s184 = sphi 0, %s168
  $region4: #{_lambda_.5} parent=0 // loop_header_branch
    %16 = sbr.rel (%p14) target = $region8
  $region5: #{_lambda_.5} parent=0 // loop_body
    %s18 = ssub.s32 %s13, 1
    %s19 = ssub.s32 %s13, 2
    %s20 = sadd.s32 %s13, 1
    %s21 = ssub.s32 %s13, %s20
    %p22 = scmp.eq.s32.totalorder %s21, 0
    %s24 = sadd.s32 %s23, 1
    %s25 = scalar_select %p22, %s23, %s24
    %p28 = pneg %p22
    %p29 = scmp.eq.s32.totalorder %s13, 1
    %p30 = por %p28, %p29
    %p31 = scmp.ne.s32.totalorder %s23, %s26
    %p32 = scmp.eq.s32.totalorder %s13, 0
    %p33 = por %p31, %p32
    %p34 = scmp.ne.s32.totalorder %s23, %s26
    %p35 = scmp.eq.s32.totalorder %s18, 1
    %p36 = por %p34, %p35
    %p37 = scmp.ne.s32.totalorder %s26, %s27
    %p38 = scmp.eq.s32.totalorder %s18, 0
    %p39 = por %p37, %p38
    %p40 = scmp.ne.s32.totalorder %s26, %s27
    %p41 = scmp.eq.s32.totalorder %s19, 1
    %p42 = por %p40, %p41
    %p44 = scmp.ne.s32.totalorder %s27, %s43
    %p45 = scmp.eq.s32.totalorder %s19, 0
    %p46 = por %p44, %p45
    %s48 = sadd.s32 %s47, 1
    %p51 = scmp.eq.s32.totalorder %s13, 1
    %p52 = scmp.ne.s32.totalorder %s47, %s49
    %p53 = scmp.eq.s32.totalorder %s13, 0
    %p54 = por %p52, %p53
    %p55 = scmp.ne.s32.totalorder %s47, %s49
    %p56 = scmp.eq.s32.totalorder %s18, 1
    %p57 = por %p55, %p56
    %p58 = scmp.ne.s32.totalorder %s49, %s50
    %p59 = scmp.eq.s32.totalorder %s18, 0
    %p60 = por %p58, %p59
    %p61 = scmp.ne.s32.totalorder %s49, %s50
    %p62 = scmp.eq.s32.totalorder %s19, 1
    %p63 = por %p61, %p62
    %p65 = scmp.ne.s32.totalorder %s50, %s64
    %p66 = scmp.eq.s32.totalorder %s19, 0
    %p67 = por %p65, %p66
    %s69 = sadd.s32 %s68, 1
    %p72 = scmp.eq.s32.totalorder %s13, 1
    %p73 = scmp.ne.s32.totalorder %s68, %s70
    %p74 = scmp.eq.s32.totalorder %s13, 0
    %p75 = por %p73, %p74
    %p76 = scmp.ne.s32.totalorder %s68, %s70
    %p77 = scmp.eq.s32.totalorder %s18, 1
    %p78 = por %p76, %p77
    %p79 = scmp.ne.s32.totalorder %s70, %s71
    %p80 = scmp.eq.s32.totalorder %s18, 0
    %p81 = por %p79, %p80
    %p82 = scmp.ne.s32.totalorder %s70, %s71
    %p83 = scmp.eq.s32.totalorder %s19, 1
    %p84 = por %p82, %p83
    %p86 = scmp.ne.s32.totalorder %s71, %s85
    %p87 = scmp.eq.s32.totalorder %s19, 0
    %p88 = por %p86, %p87
    %s90 = sadd.s32 %s89, 1
    %p93 = scmp.eq.s32.totalorder %s13, 1
    %p94 = scmp.ne.s32.totalorder %s89, %s91
    %p95 = scmp.eq.s32.totalorder %s13, 0
    %p96 = por %p94, %p95
    %p97 = scmp.ne.s32.totalorder %s89, %s91
    %p98 = scmp.eq.s32.totalorder %s18, 1
    %p99 = por %p97, %p98
    %p100 = scmp.ne.s32.totalorder %s91, %s92
    %p101 = scmp.eq.s32.totalorder %s18, 0
    %p102 = por %p100, %p101
    %p103 = scmp.ne.s32.totalorder %s91, %s92
    %p104 = scmp.eq.s32.totalorder %s19, 1
    %p105 = por %p103, %p104
    %p107 = scmp.ne.s32.totalorder %s92, %s106
    %p108 = scmp.eq.s32.totalorder %s19, 0
    %p109 = por %p107, %p108
    %s110 = ssub.s32 %s13, %s20
    %p111 = scmp.eq.s32.totalorder %s110, 0
    %s113 = sadd.s32 %s112, 1
    %s114 = scalar_select %p111, %s112, %s113
    %p117 = pneg %p111
    %p118 = scmp.eq.s32.totalorder %s13, 1
    %p119 = por %p117, %p118
    %p120 = scmp.ne.s32.totalorder %s112, %s115
    %p121 = scmp.eq.s32.totalorder %s13, 0
    %p122 = por %p120, %p121
    %p123 = scmp.ne.s32.totalorder %s112, %s115
    %p124 = scmp.eq.s32.totalorder %s18, 1
    %p125 = por %p123, %p124
    %p126 = scmp.ne.s32.totalorder %s115, %s116
    %p127 = scmp.eq.s32.totalorder %s18, 0
    %p128 = por %p126, %p127
    %p129 = scmp.ne.s32.totalorder %s115, %s116
    %p130 = scmp.eq.s32.totalorder %s19, 1
    %p131 = por %p129, %p130
    %p133 = scmp.ne.s32.totalorder %s116, %s132
    %p134 = scmp.eq.s32.totalorder %s19, 0
    %p135 = por %p133, %p134
    %s136 = ssub.s32 %s13, %s20
    %p137 = scmp.eq.s32.totalorder %s136, 0
    %s139 = sadd.s32 %s138, 1
    %s140 = scalar_select %p137, %s138, %s139
    %p143 = pneg %p137
    %p144 = scmp.eq.s32.totalorder %s13, 1
    %p145 = por %p143, %p144
    %p146 = scmp.ne.s32.totalorder %s138, %s141
    %p147 = scmp.eq.s32.totalorder %s13, 0
    %p148 = por %p146, %p147
    %p149 = scmp.ne.s32.totalorder %s138, %s141
    %p150 = scmp.eq.s32.totalorder %s18, 1
    %p151 = por %p149, %p150
    %p152 = scmp.ne.s32.totalorder %s141, %s142
    %p153 = scmp.eq.s32.totalorder %s18, 0
    %p154 = por %p152, %p153
    %p155 = scmp.ne.s32.totalorder %s141, %s142
    %p156 = scmp.eq.s32.totalorder %s19, 1
    %p157 = por %p155, %p156
    %p159 = scmp.ne.s32.totalorder %s142, %s158
    %p160 = scmp.eq.s32.totalorder %s19, 0
    %p161 = por %p159, %p160
    %s162 = ssub.s32 %s13, %s20
    %p163 = scmp.eq.s32.totalorder %s162, 0
    %s165 = sadd.s32 %s164, 1
    %s166 = scalar_select %p163, %s164, %s165
    %p169 = pneg %p163
    %p170 = scmp.eq.s32.totalorder %s13, 1
    %p171 = por %p169, %p170
    %p172 = scmp.ne.s32.totalorder %s164, %s167
    %p173 = scmp.eq.s32.totalorder %s13, 0
    %p174 = por %p172, %p173
    %p175 = scmp.ne.s32.totalorder %s164, %s167
    %p176 = scmp.eq.s32.totalorder %s18, 1
    %p177 = por %p175, %p176
    %p178 = scmp.ne.s32.totalorder %s167, %s168
    %p179 = scmp.eq.s32.totalorder %s18, 0
    %p180 = por %p178, %p179
    %p181 = scmp.ne.s32.totalorder %s167, %s168
    %p182 = scmp.eq.s32.totalorder %s19, 1
    %p183 = por %p181, %p182
    %p185 = scmp.ne.s32.totalorder %s168, %s184
    %p186 = scmp.eq.s32.totalorder %s19, 0
    %p187 = por %p185, %p186
    %p188 = scmp.le.s32.totalorder 1, %s13
    %p189 = scmp.lt.s32.totalorder %s13, 3
    %p190 = pnand %p188, %p189
    %p191 = pneg %p190
    // Predicated region
    $region9: #{_lambda_.5} parent=5 // pred_check
      _
    $region10: #{_lambda_.5} parent=5 // pred_check_branch
      %193 = sbr.rel (%p190) target = $region12
    $region11: #{_lambda_.5} parent=5 // pred_region
      %s194 = ssub.s32 %s13, 1
      // Predicated region
      $region13: #{_lambda_.5} parent=11 // pred_check
        %p195 = pneg %p60
      $region14: #{_lambda_.5} parent=11 // pred_check_branch
        %197 = sbr.rel (%p195) target = $region16
      $region15: #{_lambda_.5} parent=11 // pred_region
        _
      $region16: #{_lambda_.5} parent=11 // pred_fallthru
        _
      // Predicated region
      $region17: #{_lambda_.5} parent=11 // pred_check
        %p198 = pneg %p81
      $region18: #{_lambda_.5} parent=11 // pred_check_branch
        %200 = sbr.rel (%p198) target = $region20
      $region19: #{_lambda_.5} parent=11 // pred_region
        _
      $region20: #{_lambda_.5} parent=11 // pred_fallthru
        _
      // Predicated region
      $region21: #{_lambda_.5} parent=11 // pred_check
        %p201 = pneg %p102
      $region22: #{_lambda_.5} parent=11 // pred_check_branch
        %203 = sbr.rel (%p201) target = $region24
      $region23: #{_lambda_.5} parent=11 // pred_region
        _
      $region24: #{_lambda_.5} parent=11 // pred_fallthru
        _
    $region12: #{_lambda_.5} parent=5 // pred_fallthru
      _
    %p204 = scmp.lt.s32.totalorder %s13, 2
    // Predicated region
    $region25: #{_lambda_.5} parent=5 // pred_check
      %p205 = pneg %p204
    $region26: #{_lambda_.5} parent=5 // pred_check_branch
      %207 = sbr.rel (%p205) target = $region28
    $region27: #{_lambda_.5} parent=5 // pred_region
      // Predicated region
      $region29: #{_lambda_.5} parent=27 // pred_check
        %p208 = pneg %p33
      $region30: #{_lambda_.5} parent=27 // pred_check_branch
        %210 = sbr.rel (%p208) target = $region32
      $region31: #{_lambda_.5} parent=27 // pred_region
        %p211 = scmp.lt.s32.totalorder %s13, 1
        %s212 = scalar_select %p211, %s13, 1
        %s213 = smul.addr %s212, 20
        %s214 = smul.addr %s213, 4
        %s215 = scalar_lea.vmem %s0, %s214
      $region32: #{_lambda_.5} parent=27 // pred_fallthru
        _
    $region28: #{_lambda_.5} parent=5 // pred_fallthru
      _
    %p216 = scmp.le.s32.totalorder 1, %s13
    %p217 = scmp.lt.s32.totalorder %s13, 3
    %p218 = pnand %p216, %p217
    %p219 = pneg %p218
    // Predicated region
    $region33: #{_lambda_.5} parent=5 // pred_check
      _
    $region34: #{_lambda_.5} parent=5 // pred_check_branch
      %221 = sbr.rel (%p218) target = $region36
    $region35: #{_lambda_.5} parent=5 // pred_region
      %s222 = ssub.s32 %s13, 1
      %p223 = scmp.lt.s32.totalorder %s18, 1
      %s224 = scalar_select %p223, %s18, 1
      %s225 = smul.addr %s224, 20
      %s226 = smul.addr %s225, 4
      %s227 = scalar_lea.vmem %s0, %s226
      %p228 = pneg %p39
      %p229 = pneg %p36
      %p230 = pneg %p60
      %p231 = pneg %p57
      %p232 = pneg %p81
      %p233 = pneg %p78
      %p234 = pneg %p102
      %p235 = pneg %p99
      %p236 = pneg %p128
      %p237 = pneg %p125
      %p238 = scmp.lt.s32.totalorder %s18, 1
      %s239 = scalar_select %p238, %s18, 1
      %s240 = smul.addr %s239, 8
      %s241 = smul.addr %s240, 4
      %s242 = scalar_lea.vmem %s4, %s241
      %p243 = pneg %p154
      %p244 = pneg %p151
      %p245 = scmp.lt.s32.totalorder %s18, 1
      %s246 = scalar_select %p245, %s18, 1
      %s247 = scalar_lea.vmem %s5, %s246
      %p248 = pneg %p180
      %p249 = pneg %p177
      %p250 = scmp.lt.s32.totalorder %s18, 1
      %s251 = scalar_select %p250, %s18, 1
      %s252 = scalar_lea.vmem %s6, %s251
      %p253 = scmp.lt.s32.totalorder %s18, 1
      %s254 = scalar_select %p253, %s18, 1
      %s255 = smul.addr %s254, 20
      %s256 = smul.addr %s255, 4
      %s257 = scalar_lea.vmem %s0, %s256
      %p258 = scmp.lt.s32.totalorder %s18, 1
      %s259 = scalar_select %p258, %s18, 1
      %s260 = smul.addr %s259, 8
      %s261 = smul.addr %s260, 4
      %s262 = scalar_lea.vmem %s4, %s261
      %p263 = scmp.lt.s32.totalorder %s18, 1
      %s264 = scalar_select %p263, %s18, 1
      %s265 = scalar_lea.vmem %s5, %s264
      %p266 = scmp.lt.s32.totalorder %s18, 1
      %s267 = scalar_select %p266, %s18, 1
      %s268 = scalar_lea.vmem %s6, %s267
      %v270 = vld [vmem:[%s257] sm:$0xf]
      %v271 = vld [vmem:[%s257 + $0x4] sm:$0x1]
      %v272 = vld [vmem:[%s257 + $0x8] sm:$0xf]
      %v273 = vld [vmem:[%s257 + $0xc] sm:$0x1]
      %v274 = vld [vmem:[%s257 + $0x10] sm:$0xf]
      %v275 = vld [vmem:[%s257 + $0x14] sm:$0x1]
      %v276 = vld [vmem:[%s257 + $0x18] sm:$0xf]
      %v277 = vld [vmem:[%s257 + $0x1c] sm:$0x1]
      %v278 = vld [vmem:[%s257 + $0x20] sm:$0xf]
      %v279 = vld [vmem:[%s257 + $0x24] sm:$0x1]
      %v280 = vld [vmem:[%s257 + $0x28] sm:$0xf]
      %v281 = vld [vmem:[%s257 + $0x2c] sm:$0x1]
      %v282 = vld [vmem:[%s257 + $0x30] sm:$0xf]
      %v283 = vld [vmem:[%s257 + $0x34] sm:$0x1]
      %v284 = vld [vmem:[%s257 + $0x38] sm:$0xf]
      %v285 = vld [vmem:[%s257 + $0x3c] sm:$0x1]
      %v286 = vld [vmem:[%s257 + $0x40] sm:$0xf]
      %v287 = vld [vmem:[%s257 + $0x44] sm:$0x1]
      %v288 = vld [vmem:[%s257 + $0x48] sm:$0xf]
      %v289 = vld [vmem:[%s257 + $0x4c] sm:$0x1]
      %v290 = vunpack.c.l.bf16 %v270
      %v291 = vunpack.c.l.bf16 %v271
      %v292 = vunpack.c.l.bf16 %v272
      %v293 = vunpack.c.l.bf16 %v273
      %v294 = vunpack.c.l.bf16 %v274
      %v295 = vunpack.c.l.bf16 %v275
      %v296 = vunpack.c.l.bf16 %v276
      %v297 = vunpack.c.l.bf16 %v277
      %v298 = vunpack.c.l.bf16 %v278
      %v299 = vunpack.c.l.bf16 %v279
      %v300 = vunpack.c.l.bf16 %v280
      %v301 = vunpack.c.l.bf16 %v281
      %v302 = vunpack.c.l.bf16 %v282
      %v303 = vunpack.c.l.bf16 %v283
      %v304 = vunpack.c.l.bf16 %v284
      %v305 = vunpack.c.l.bf16 %v285
      %v306 = vunpack.c.l.bf16 %v286
      %v307 = vunpack.c.l.bf16 %v287
      %v308 = vunpack.c.l.bf16 %v288
      %v309 = vunpack.c.l.bf16 %v289
      %v310 = vld [vmem:[%s1] sm:$0x1]
      %v312 = vlaneseq
      %v313 = vshrl.u32 %v312, 7
      %v314 = vsub.s32 0, %v313
      %v315 = vrot.slane %v310, %v314
      %v317 = vmul.f32 %v290, %v315
      %v318 = vmul.f32 %v291, %v315
      %v319 = vmul.f32 %v292, %v315
      %v320 = vmul.f32 %v293, %v315
      %v321 = vmul.f32 %v294, %v315
      %v322 = vmul.f32 %v295, %v315
      %v323 = vmul.f32 %v296, %v315
      %v324 = vmul.f32 %v297, %v315
      %v325 = vmul.f32 %v298, %v315
      %v326 = vmul.f32 %v299, %v315
      %v327 = vmul.f32 %v300, %v315
      %v328 = vmul.f32 %v301, %v315
      %v329 = vmul.f32 %v302, %v315
      %v330 = vmul.f32 %v303, %v315
      %v331 = vmul.f32 %v304, %v315
      %v332 = vmul.f32 %v305, %v315
      %v333 = vmul.f32 %v306, %v315
      %v334 = vmul.f32 %v307, %v315
      %v335 = vmul.f32 %v308, %v315
      %v336 = vmul.f32 %v309, %v315
      %v337 = vld [vmem:[%s2] sm:$0x1]
      %v339 = vlaneseq
      %v340 = vshrl.u32 %v339, 7
      %v341 = vsub.s32 0, %v340
      %v342 = vrot.slane %v337, %v341
      %v344 = vadd.f32 %v317, %v342
      %v345 = vadd.f32 %v318, %v342
      %v346 = vadd.f32 %v319, %v342
      %v347 = vadd.f32 %v320, %v342
      %v348 = vadd.f32 %v321, %v342
      %v349 = vadd.f32 %v322, %v342
      %v350 = vadd.f32 %v323, %v342
      %v351 = vadd.f32 %v324, %v342
      %v352 = vadd.f32 %v325, %v342
      %v353 = vadd.f32 %v326, %v342
      %v354 = vadd.f32 %v327, %v342
      %v355 = vadd.f32 %v328, %v342
      %v356 = vadd.f32 %v329, %v342
      %v357 = vadd.f32 %v330, %v342
      %v358 = vadd.f32 %v331, %v342
      %v359 = vadd.f32 %v332, %v342
      %v360 = vadd.f32 %v333, %v342
      %v361 = vadd.f32 %v334, %v342
      %v362 = vadd.f32 %v335, %v342
      %v363 = vadd.f32 %v336, %v342
      %v364 = vmax.f32 %v344, 0.0
      %v365 = vmax.f32 %v345, 0.0
      %v366 = vmax.f32 %v346, 0.0
      %v367 = vmax.f32 %v347, 0.0
      %v368 = vmax.f32 %v348, 0.0
      %v369 = vmax.f32 %v349, 0.0
      %v370 = vmax.f32 %v350, 0.0
      %v371 = vmax.f32 %v351, 0.0
      %v372 = vmax.f32 %v352, 0.0
      %v373 = vmax.f32 %v353, 0.0
      %v374 = vmax.f32 %v354, 0.0
      %v375 = vmax.f32 %v355, 0.0
      %v376 = vmax.f32 %v356, 0.0
      %v377 = vmax.f32 %v357, 0.0
      %v378 = vmax.f32 %v358, 0.0
      %v379 = vmax.f32 %v359, 0.0
      %v380 = vmax.f32 %v360, 0.0
      %v381 = vmax.f32 %v361, 0.0
      %v382 = vmax.f32 %v362, 0.0
      %v383 = vmax.f32 %v363, 0.0
      %vm400 = vcmask 1046528
      %v401 = vrot.slane %v364, 1
      %v402 = vrot.slane %v365, 1
      %v403 = vsel %vm400, %v401, %v402
      %v404 = vrot.slane %v366, 1
      %v405 = vrot.slane %v367, 1
      %v406 = vsel %vm400, %v404, %v405
      %v407 = vrot.slane %v368, 1
      %v408 = vrot.slane %v369, 1
      %v409 = vsel %vm400, %v407, %v408
      %v410 = vrot.slane %v370, 1
      %v411 = vrot.slane %v371, 1
      %v412 = vsel %vm400, %v410, %v411
      %v413 = vrot.slane %v372, 1
      %v414 = vrot.slane %v373, 1
      %v415 = vsel %vm400, %v413, %v414
      %v416 = vrot.slane %v374, 1
      %v417 = vrot.slane %v375, 1
      %v418 = vsel %vm400, %v416, %v417
      %v419 = vrot.slane %v376, 1
      %v420 = vrot.slane %v377, 1
      %v421 = vsel %vm400, %v419, %v420
      %v422 = vrot.slane %v378, 1
      %v423 = vrot.slane %v379, 1
      %v424 = vsel %vm400, %v422, %v423
      %vm425 = vcmask 1045504
      %v426 = vrot.slane %v364, 2
      %v427 = vrot.slane %v365, 2
      %v428 = vsel %vm425, %v426, %v427
      %v429 = vrot.slane %v366, 2
      %v430 = vrot.slane %v367, 2
      %v431 = vsel %vm425, %v429, %v430
      %v432 = vrot.slane %v368, 2
      %v433 = vrot.slane %v369, 2
      %v434 = vsel %vm425, %v432, %v433
      %v435 = vrot.slane %v370, 2
      %v436 = vrot.slane %v371, 2
      %v437 = vsel %vm425, %v435, %v436
      %v438 = vrot.slane %v372, 2
      %v439 = vrot.slane %v373, 2
      %v440 = vsel %vm425, %v438, %v439
      %v441 = vrot.slane %v374, 2
      %v442 = vrot.slane %v375, 2
      %v443 = vsel %vm425, %v441, %v442
      %v444 = vrot.slane %v376, 2
      %v445 = vrot.slane %v377, 2
      %v446 = vsel %vm425, %v444, %v445
      %v447 = vrot.slane %v378, 2
      %v448 = vrot.slane %v379, 2
      %v449 = vsel %vm425, %v447, %v448
      %v460 = vrot.slane %v380, 1
      %v461 = vrot.slane %v381, 1
      %v462 = vsel %vm400, %v460, %v461
      %v471 = vrot.slane %v380, 2
      %v472 = vrot.slane %v381, 2
      %v473 = vsel %vm425, %v471, %v472
      %v476 = vrot.slane %v382, 1
      %v477 = vrot.slane %v383, 1
      %v478 = vsel %vm400, %v476, %v477
      %v479 = vrot.slane %v382, 2
      %v480 = vrot.slane %v383, 2
      %v481 = vsel %vm425, %v479, %v480
      %484 = vrot.lane.b32.xlu0 %v403, 64
      %v485 = vpop.permute.xlu0 %484
      %486 = vrot.lane.b32.xlu0 %v406, 64
      %v487 = vpop.permute.xlu0 %486
      %488 = vrot.lane.b32.xlu0 %v409, 64
      %v489 = vpop.permute.xlu0 %488
      %490 = vrot.lane.b32.xlu0 %v412, 64
      %v491 = vpop.permute.xlu0 %490
      %492 = vrot.lane.b32.xlu0 %v415, 64
      %v493 = vpop.permute.xlu0 %492
      %494 = vrot.lane.b32.xlu0 %v418, 64
      %v495 = vpop.permute.xlu0 %494
      %496 = vrot.lane.b32.xlu0 %v421, 64
      %v497 = vpop.permute.xlu0 %496
      %498 = vrot.lane.b32.xlu0 %v424, 64
      %v499 = vpop.permute.xlu0 %498
      %508 = vrot.lane.b32.xlu0 %v366, 64
      %v509 = vpop.permute.xlu0 %508
      %510 = vrot.lane.b32.xlu0 %v368, 64
      %v511 = vpop.permute.xlu0 %510
      %512 = vrot.lane.b32.xlu0 %v370, 64
      %v513 = vpop.permute.xlu0 %512
      %514 = vrot.lane.b32.xlu0 %v372, 64
      %v515 = vpop.permute.xlu0 %514
      %516 = vrot.lane.b32.xlu0 %v374, 64
      %v517 = vpop.permute.xlu0 %516
      %518 = vrot.lane.b32.xlu0 %v376, 64
      %v519 = vpop.permute.xlu0 %518
      %520 = vrot.lane.b32.xlu0 %v378, 64
      %v521 = vpop.permute.xlu0 %520
      %522 = vrot.lane.b32.xlu0 %v380, 64
      %v523 = vpop.permute.xlu0 %522
      %532 = vrot.lane.b32.xlu0 %v431, 64
      %v533 = vpop.permute.xlu0 %532
      %534 = vrot.lane.b32.xlu0 %v434, 64
      %v535 = vpop.permute.xlu0 %534
      %536 = vrot.lane.b32.xlu0 %v437, 64
      %v537 = vpop.permute.xlu0 %536
      %538 = vrot.lane.b32.xlu0 %v440, 64
      %v539 = vpop.permute.xlu0 %538
      %540 = vrot.lane.b32.xlu0 %v443, 64
      %v541 = vpop.permute.xlu0 %540
      %542 = vrot.lane.b32.xlu0 %v446, 64
      %v543 = vpop.permute.xlu0 %542
      %544 = vrot.lane.b32.xlu0 %v449, 64
      %v545 = vpop.permute.xlu0 %544
      %546 = vrot.lane.b32.xlu0 %v473, 64
      %v547 = vpop.permute.xlu0 %546
      %556 = vrot.lane.b32.xlu0 %v462, 64
      %v557 = vpop.permute.xlu0 %556
      %558 = vrot.lane.b32.xlu0 %v478, 64
      %v559 = vpop.permute.xlu0 %558
      %vm562 = vcmask 523264
      %v563 = vsel %vm562, %v364, %v485
      %v564 = vsel %vm562, %v366, %v487
      %v565 = vsel %vm562, %v368, %v489
      %v566 = vsel %vm562, %v370, %v491
      %v567 = vsel %vm562, %v372, %v493
      %v568 = vsel %vm562, %v374, %v495
      %v569 = vsel %vm562, %v376, %v497
      %v570 = vsel %vm562, %v378, %v499
      %v571 = vsel %vm562, %v428, %v509
      %v572 = vsel %vm562, %v431, %v511
      %v573 = vsel %vm562, %v434, %v513
      %v574 = vsel %vm562, %v437, %v515
      %v575 = vsel %vm562, %v440, %v517
      %v576 = vsel %vm562, %v443, %v519
      %v577 = vsel %vm562, %v446, %v521
      %v578 = vsel %vm562, %v449, %v523
      %v579 = vsel %vm562, %v406, %v533
      %v580 = vsel %vm562, %v409, %v535
      %v581 = vsel %vm562, %v412, %v537
      %v582 = vsel %vm562, %v415, %v539
      %v583 = vsel %vm562, %v418, %v541
      %v584 = vsel %vm562, %v421, %v543
      %v585 = vsel %vm562, %v424, %v545
      %v586 = vsel %vm562, %v462, %v547
      %v587 = vsel %vm562, %v380, %v557
      %v588 = vsel %vm562, %v382, %v559
      %v589 = vpack.c.bf16 %v564, %v563
      %v590 = vpack.c.bf16 %v572, %v571
      %v591 = vpack.c.bf16 %v580, %v579
      %v592 = vpack.c.bf16 %v566, %v565
      %v593 = vpack.c.bf16 %v437, %v434
      %v594 = vpack.c.bf16 %v574, %v573
      %v595 = vpack.c.bf16 %v582, %v581
      %v596 = vpack.c.bf16 %v568, %v567
      %v597 = vpack.c.bf16 %v443, %v440
      %v598 = vpack.c.bf16 %v576, %v575
      %v599 = vpack.c.bf16 %v584, %v583
      %v600 = vpack.c.bf16 %v570, %v569
      %v601 = vpack.c.bf16 %v449, %v446
      %v602 = vpack.c.bf16 %v578, %v577
      %v603 = vpack.c.bf16 %v586, %v585
      %v604 = vpack.c.bf16 %v588, %v587
      %v605 = vpack.c.bf16 %v481, %v473
      %v606 = vld [vmem:[%s3] sm:$0xf]
      %v607 = vld [vmem:[%s3 + $0x4] sm:$0xf]
      %v608 = vld [vmem:[%s3 + $0x8] sm:$0xf]
      %v609 = vld [vmem:[%s3 + $0xc] sm:$0xf]
      %v610 = vld [vmem:[%s3 + $0x10] sm:$0xf]
      %v611 = vld [vmem:[%s3 + $0x14] sm:$0xf]
      %v612 = vld [vmem:[%s3 + $0x18] sm:$0xf]
      %v613 = vld [vmem:[%s3 + $0x1c] sm:$0xf]
      %v614 = vld [vmem:[%s3 + $0x20] sm:$0xf]
      %v615 = vld [vmem:[%s3 + $0x24] sm:$0xf]
      %v616 = vld [vmem:[%s3 + $0x28] sm:$0xf]
      %v617 = vld [vmem:[%s3 + $0x2c] sm:$0xf]
      %v618 = vld [vmem:[%s3 + $0x30] sm:$0xf]
      %v619 = vld [vmem:[%s3 + $0x34] sm:$0xf]
      %v620 = vld [vmem:[%s3 + $0x38] sm:$0xf]
      %v621 = vld [vmem:[%s3 + $0x3c] sm:$0xf]
      %v622 = vld [vmem:[%s3 + $0x40] sm:$0xf]
      %v623 = vld [vmem:[%s3 + $0x44] sm:$0xf]
      %v624 = vld [vmem:[%s3 + $0x48] sm:$0xf]
      %v625 = vld [vmem:[%s3 + $0x4c] sm:$0xf]
      %v626 = vld [vmem:[%s3 + $0x50] sm:$0xf]
      %v627 = vld [vmem:[%s3 + $0x54] sm:$0xf]
      %v628 = vld [vmem:[%s3 + $0x58] sm:$0xf]
      %v629 = vld [vmem:[%s3 + $0x5c] sm:$0xf]
      %v630 = vld [vmem:[%s3 + $0x60] sm:$0xf]
      %v631 = vld [vmem:[%s3 + $0x64] sm:$0xf]
      %v632 = vld [vmem:[%s3 + $0x68] sm:$0xf]
      %v633 = vld [vmem:[%s3 + $0x6c] sm:$0xf]
      %v634 = vld [vmem:[%s3 + $0x70] sm:$0xf]
      %v635 = vld [vmem:[%s3 + $0x74] sm:$0xf]
      %v636 = vld [vmem:[%s3 + $0x78] sm:$0xf]
      %v637 = vld [vmem:[%s3 + $0x7c] sm:$0xf]
      %v638 = vld [vmem:[%s3 + $0x80] sm:$0xf]
      %v639 = vld [vmem:[%s3 + $0x84] sm:$0xf]
      %v640 = vld [vmem:[%s3 + $0x88] sm:$0xf]
      %v641 = vld [vmem:[%s3 + $0x8c] sm:$0xf]
      %v642 = vld [vmem:[%s3 + $0x90] sm:$0xf]
      %v643 = vld [vmem:[%s3 + $0x94] sm:$0xf]
      %v644 = vld [vmem:[%s3 + $0x98] sm:$0xf]
      %v645 = vld [vmem:[%s3 + $0x9c] sm:$0xf]
      %v646 = vld [vmem:[%s3 + $0xa0] sm:$0xf]
      %v647 = vld [vmem:[%s3 + $0xa4] sm:$0xf]
      %v648 = vld [vmem:[%s3 + $0xa8] sm:$0xf]
      %v649 = vld [vmem:[%s3 + $0xac] sm:$0xf]
      %v650 = vld [vmem:[%s3 + $0xb0] sm:$0xf]
      %v651 = vld [vmem:[%s3 + $0xb4] sm:$0xf]
      %v652 = vld [vmem:[%s3 + $0xb8] sm:$0xf]
      %v653 = vld [vmem:[%s3 + $0xbc] sm:$0xf]
      %v654 = vld [vmem:[%s3 + $0xc0] sm:$0xf]
      %v655 = vld [vmem:[%s3 + $0xc4] sm:$0xf]
      %v656 = vld [vmem:[%s3 + $0xc8] sm:$0xf]
      %v657 = vld [vmem:[%s3 + $0xcc] sm:$0xf]
      %v658 = vld [vmem:[%s3 + $0xd0] sm:$0xf]
      %v659 = vld [vmem:[%s3 + $0xd4] sm:$0xf]
      %v660 = vld [vmem:[%s3 + $0xd8] sm:$0xf]
      %v661 = vld [vmem:[%s3 + $0xdc] sm:$0xf]
      %v662 = vld [vmem:[%s3 + $0xe0] sm:$0xf]
      %v663 = vld [vmem:[%s3 + $0xe4] sm:$0xf]
      %v664 = vld [vmem:[%s3 + $0xe8] sm:$0xf]
      %v665 = vld [vmem:[%s3 + $0xec] sm:$0xf]
      %v666 = vld [vmem:[%s3 + $0xf0] sm:$0xf]
      %v667 = vld [vmem:[%s3 + $0xf4] sm:$0xf]
      %v668 = vld [vmem:[%s3 + $0xf8] sm:$0xf]
      %v669 = vld [vmem:[%s3 + $0xfc] sm:$0xf]
      %v670 = vld [vmem:[%s3 + $0x100] sm:$0xf]
      %v671 = vld [vmem:[%s3 + $0x104] sm:$0xf]
      %v672 = vld [vmem:[%s3 + $0x108] sm:$0xf]
      %v673 = vld [vmem:[%s3 + $0x10c] sm:$0xf]
      %v674 = vld [vmem:[%s3 + $0x110] sm:$0xf]
      %v675 = vld [vmem:[%s3 + $0x114] sm:$0xf]
      %v676 = vld [vmem:[%s3 + $0x118] sm:$0xf]
      %v677 = vld [vmem:[%s3 + $0x11c] sm:$0xf]
      %v750 = vunpack.c.l.b16 %v606
      %v751 = vunpack.c.l.b16 %v607
      %v752 = vunpack.c.l.b16 %v608
      %v753 = vunpack.c.l.b16 %v609
      %v754 = vunpack.c.l.b16 %v610
      %v755 = vunpack.c.l.b16 %v611
      %v756 = vunpack.c.l.b16 %v612
      %v757 = vunpack.c.l.b16 %v613
      %v758 = vunpack.c.l.b16 %v614
      %v759 = vunpack.c.l.b16 %v615
      %v760 = vunpack.c.l.b16 %v616
      %v761 = vunpack.c.l.b16 %v617
      %v762 = vunpack.c.l.b16 %v618
      %v763 = vunpack.c.l.b16 %v619
      %v764 = vunpack.c.l.b16 %v620
      %v765 = vunpack.c.l.b16 %v621
      %v766 = vunpack.c.l.b16 %v622
      %v767 = vunpack.c.l.b16 %v623
      %v768 = vunpack.c.l.b16 %v624
      %v769 = vunpack.c.l.b16 %v625
      %v770 = vunpack.c.l.b16 %v626
      %v771 = vunpack.c.l.b16 %v627
      %v772 = vunpack.c.l.b16 %v628
      %v773 = vunpack.c.l.b16 %v629
      %v774 = vunpack.c.l.b16 %v630
      %v775 = vunpack.c.l.b16 %v631
      %v776 = vunpack.c.l.b16 %v632
      %v777 = vunpack.c.l.b16 %v633
      %v778 = vunpack.c.l.b16 %v634
      %v779 = vunpack.c.l.b16 %v635
      %v780 = vunpack.c.l.b16 %v636
      %v781 = vunpack.c.l.b16 %v637
      %v782 = vunpack.c.l.b16 %v638
      %v783 = vunpack.c.l.b16 %v639
      %v784 = vunpack.c.l.b16 %v640
      %v785 = vunpack.c.l.b16 %v641
      %v786 = vunpack.c.l.b16 %v642
      %v787 = vunpack.c.l.b16 %v643
      %v788 = vunpack.c.l.b16 %v644
      %v789 = vunpack.c.l.b16 %v645
      %v790 = vunpack.c.l.b16 %v646
      %v791 = vunpack.c.l.b16 %v647
      %v792 = vunpack.c.l.b16 %v648
      %v793 = vunpack.c.l.b16 %v649
      %v794 = vunpack.c.l.b16 %v650
      %v795 = vunpack.c.l.b16 %v651
      %v796 = vunpack.c.l.b16 %v652
      %v797 = vunpack.c.l.b16 %v653
      %v798 = vunpack.c.l.b16 %v654
      %v799 = vunpack.c.l.b16 %v655
      %v800 = vunpack.c.l.b16 %v656
      %v801 = vunpack.c.l.b16 %v657
      %v802 = vunpack.c.l.b16 %v658
      %v803 = vunpack.c.l.b16 %v659
      %v804 = vunpack.c.l.b16 %v660
      %v805 = vunpack.c.l.b16 %v661
      %v806 = vunpack.c.l.b16 %v662
      %v807 = vunpack.c.l.b16 %v663
      %v808 = vunpack.c.l.b16 %v664
      %v809 = vunpack.c.l.b16 %v665
      %v810 = vunpack.c.l.b16 %v666
      %v811 = vunpack.c.l.b16 %v667
      %v812 = vunpack.c.l.b16 %v668
      %v813 = vunpack.c.l.b16 %v669
      %v814 = vunpack.c.l.b16 %v670
      %v815 = vunpack.c.l.b16 %v671
      %v816 = vunpack.c.l.b16 %v672
      %v817 = vunpack.c.l.b16 %v673
      %v818 = vunpack.c.l.b16 %v674
      %v819 = vunpack.c.l.b16 %v675
      %v820 = vunpack.c.l.b16 %v676
      %v821 = vunpack.c.l.b16 %v677
      %v822 = vpack.c.b16 %v751, %v750
      %v823 = vpack.c.b16 %v753, %v752
      %v824 = vpack.c.b16 %v755, %v754
      %v825 = vpack.c.b16 %v757, %v756
      %v826 = vpack.c.b16 %v759, %v758
      %v827 = vpack.c.b16 %v761, %v760
      %v828 = vpack.c.b16 %v763, %v762
      %v829 = vpack.c.b16 %v765, %v764
      %v830 = vpack.c.b16 %v767, %v766
      %v831 = vpack.c.b16 %v769, %v768
      %v832 = vpack.c.b16 %v771, %v770
      %v833 = vpack.c.b16 %v773, %v772
      %v834 = vpack.c.b16 %v775, %v774
      %v835 = vpack.c.b16 %v777, %v776
      %v836 = vpack.c.b16 %v779, %v778
      %v837 = vpack.c.b16 %v781, %v780
      %v838 = vpack.c.b16 %v783, %v782
      %v839 = vpack.c.b16 %v785, %v784
      %v840 = vpack.c.b16 %v787, %v786
      %v841 = vpack.c.b16 %v789, %v788
      %v842 = vpack.c.b16 %v791, %v790
      %v843 = vpack.c.b16 %v793, %v792
      %v844 = vpack.c.b16 %v795, %v794
      %v845 = vpack.c.b16 %v797, %v796
      %v846 = vpack.c.b16 %v799, %v798
      %v847 = vpack.c.b16 %v801, %v800
      %v848 = vpack.c.b16 %v803, %v802
      %v849 = vpack.c.b16 %v805, %v804
      %v850 = vpack.c.b16 %v807, %v806
      %v851 = vpack.c.b16 %v809, %v808
      %v852 = vpack.c.b16 %v811, %v810
      %v853 = vpack.c.b16 %v813, %v812
      %v854 = vpack.c.b16 %v815, %v814
      %v855 = vpack.c.b16 %v817, %v816
      %v856 = vpack.c.b16 %v819, %v818
      %v857 = vpack.c.b16 %v821, %v820
      %v895 = vsel %vm562, %v593, 0
      %v898 = vsel %vm562, %v597, 0
      %v901 = vsel %vm562, %v601, 0
      %v904 = vsel %vm562, %v605, 0
      %906 = vmatprep.subr.bf16.mxu0 0
      %907 = vmatpush1.bf16.msra.mxu0 %v822
      %908 = vmatprep.subr.bf16.mxu0 0
      %909 = vmatpush1.bf16.msra.mxu0 %v823
      %910 = vmatprep.subr.bf16.mxu0 0
      %911 = vmatpush1.bf16.msra.mxu0 %v824
      %912 = vmatprep.subr.bf16.mxu0 0
      %913 = vmatpush1.bf16.msra.mxu0 %v825
      %914 = vmatprep.subr.bf16.mxu0 0
      %915 = vmatpush1.bf16.msra.mxu0 %v826
      %916 = vmatprep.subr.bf16.mxu0 0
      %917 = vmatpush1.bf16.msra.mxu0 %v827
      %918 = vmatprep.subr.bf16.mxu0 0
      %919 = vmatpush1.bf16.msra.mxu0 %v828
      %920 = vmatprep.subr.bf16.mxu0 0
      %921 = vmatpush1.bf16.msra.mxu0 %v829
      %922 = vmatprep.subr.bf16.mxu0 0
      %923 = vmatpush1.bf16.msra.mxu0 %v830
      %924 = vmatprep.subr.bf16.mxu0 0
      %925 = vmatpush1.bf16.msra.mxu0 %v831
      %926 = vmatprep.subr.bf16.mxu0 0
      %927 = vmatpush1.bf16.msra.mxu0 %v832
      %928 = vmatprep.subr.bf16.mxu0 0
      %929 = vmatpush1.bf16.msra.mxu0 %v833
      %930 = vmatprep.subr.bf16.mxu0 0
      %931 = vmatpush1.bf16.msra.mxu0 %v834
      %932 = vmatprep.subr.bf16.mxu0 0
      %933 = vmatpush1.bf16.msra.mxu0 %v835
      %934 = vmatprep.subr.bf16.mxu0 0
      %935 = vmatpush1.bf16.msra.mxu0 %v836
      %936 = vmatprep.subr.bf16.mxu0 0
      %937 = vmatpush1.bf16.msra.mxu0 %v837
      %938 = vmatprep.mubr.bf16.mxu0 %v590
      %939 = vmatmul.mubr.bf16.gmra.mrb[0].mxu0 %v589
      %v940 = vpop.f32.mrb[0].mxu0
      %v941 = vadd.f32 0.0, %v940
      %v942 = vpop.f32.mrb[0].mxu0
      %v943 = vpop.f32.mrb[0].mxu0
      %v944 = vadd.f32 0.0, %v943
      %v945 = vpop.f32.mrb[0].mxu0
      %946 = vmatprep.mubr.bf16.mxu0 %v594
      %947 = vmatmul.mubr.bf16.gmra.mrb[0].mxu0 %v592
      %v948 = vpop.f32.mrb[0].mxu0
      %v949 = vadd.f32 0.0, %v948
      %v950 = vpop.f32.mrb[0].mxu0
      %v951 = vpop.f32.mrb[0].mxu0
      %v952 = vadd.f32 0.0, %v951
      %v953 = vpop.f32.mrb[0].mxu0
      %954 = vmatprep.mubr.bf16.mxu0 %v598
      %955 = vmatmul.mubr.bf16.gmra.mrb[0].mxu0 %v596
      %v956 = vpop.f32.mrb[0].mxu0
      %v957 = vadd.f32 0.0, %v956
      %v958 = vpop.f32.mrb[0].mxu0
      %v959 = vpop.f32.mrb[0].mxu0
      %v960 = vadd.f32 0.0, %v959
      %v961 = vpop.f32.mrb[0].mxu0
      %962 = vmatprep.mubr.bf16.mxu0 %v602
      %963 = vmatmul.mubr.bf16.gmra.mrb[0].mxu0 %v600
      %v964 = vpop.f32.mrb[0].mxu0
      %v965 = vadd.f32 0.0, %v964
      %v966 = vpop.f32.mrb[0].mxu0
      %v967 = vpop.f32.mrb[0].mxu0
      %v968 = vadd.f32 0.0, %v967
      %v969 = vpop.f32.mrb[0].mxu0
      %970 = vdwg.mxu0
      %971 = vmatprep.subr.bf16.mxu0 0
      %972 = vmatpush1.bf16.msra.mxu0 %v838
      %973 = vmatprep.subr.bf16.mxu0 0
      %974 = vmatpush1.bf16.msra.mxu0 %v839
      %975 = vmatprep.subr.bf16.mxu0 0
      %976 = vmatpush1.bf16.msra.mxu0 %v840
      %977 = vmatprep.subr.bf16.mxu0 0
      %978 = vmatpush1.bf16.msra.mxu0 %v841
      %979 = vmatprep.subr.bf16.mxu0 0
      %980 = vmatpush1.bf16.msra.mxu0 %v842
      %981 = vmatprep.subr.bf16.mxu0 0
      %982 = vmatpush1.bf16.msra.mxu0 %v843
      %983 = vmatprep.subr.bf16.mxu0 0
      %984 = vmatpush1.bf16.msra.mxu0 %v844
      %985 = vmatprep.subr.bf16.mxu0 0
      %986 = vmatpush1.bf16.msra.mxu0 %v845
      %987 = vmatprep.subr.bf16.mxu0 0
      %988 = vmatpush1.bf16.msra.mxu0 %v846
      %989 = vmatprep.subr.bf16.mxu0 0
      %990 = vmatpush1.bf16.msra.mxu0 %v847
      %991 = vmatprep.subr.bf16.mxu0 0
      %992 = vmatpush1.bf16.msra.mxu0 %v848
      %993 = vmatprep.subr.bf16.mxu0 0
      %994 = vmatpush1.bf16.msra.mxu0 %v849
      %995 = vmatprep.subr.bf16.mxu0 0
      %996 = vmatpush1.bf16.msra.mxu0 %v850
      %997 = vmatprep.subr.bf16.mxu0 0
      %998 = vmatpush1.bf16.msra.mxu0 %v851
      %999 = vmatprep.subr.bf16.mxu0 0
      %1000 = vmatpush1.bf16.msra.mxu0 %v852
      %1001 = vmatprep.subr.bf16.mxu0 0
      %1002 = vmatpush1.bf16.msra.mxu0 %v853
      %1003 = vmatprep.mubr.bf16.mxu0 %v592
      %1004 = vmatmul.mubr.bf16.gmra.mrb[0].mxu0 %v591
      %v1005 = vpop.f32.mrb[0].mxu0
      %v1006 = vadd.f32 %v941, %v1005
      %v1007 = vpop.f32.mrb[0].mxu0
      %v1008 = vpop.f32.mrb[0].mxu0
      %v1009 = vadd.f32 %v944, %v1008
      %v1010 = vpop.f32.mrb[0].mxu0
      %1011 = vmatprep.mubr.bf16.mxu0 %v596
      %1012 = vmatmul.mubr.bf16.gmra.mrb[0].mxu0 %v595
      %v1013 = vpop.f32.mrb[0].mxu0
      %v1014 = vadd.f32 %v949, %v1013
      %v1015 = vpop.f32.mrb[0].mxu0
      %v1016 = vpop.f32.mrb[0].mxu0
      %v1017 = vadd.f32 %v952, %v1016
      %v1018 = vpop.f32.mrb[0].mxu0
      %1019 = vmatprep.mubr.bf16.mxu0 %v600
      %1020 = vmatmul.mubr.bf16.gmra.mrb[0].mxu0 %v599
      %v1021 = vpop.f32.mrb[0].mxu0
      %v1022 = vadd.f32 %v957, %v1021
      %v1023 = vpop.f32.mrb[0].mxu0
      %v1024 = vpop.f32.mrb[0].mxu0
      %v1025 = vadd.f32 %v960, %v1024
      %v1026 = vpop.f32.mrb[0].mxu0
      %1027 = vmatprep.mubr.bf16.mxu0 %v604
      %1028 = vmatmul.mubr.bf16.gmra.mrb[0].mxu0 %v603
      %v1029 = vpop.f32.mrb[0].mxu0
      %v1030 = vadd.f32 %v965, %v1029
      %v1031 = vpop.f32.mrb[0].mxu0
      %v1032 = vpop.f32.mrb[0].mxu0
      %v1033 = vadd.f32 %v968, %v1032
      %v1034 = vpop.f32.mrb[0].mxu0
      %1035 = vdwg.mxu0
      %1036 = vmatprep.subr.bf16.mxu0 0
      %1037 = vmatpush1.bf16.msra.mxu0 %v854
      %1038 = vmatprep.subr.bf16.mxu0 0
      %1039 = vmatpush1.bf16.msra.mxu0 %v855
      %1040 = vmatprep.subr.bf16.mxu0 0
      %1041 = vmatpush1.bf16.msra.mxu0 %v856
      %1042 = vmatprep.subr.bf16.mxu0 0
      %1043 = vmatpush1.bf16.msra.mxu0 %v857
      %1044 = vmatprep.subr.bf16.mxu0 0
      %1045 = vmatpush1.bf16.msra.mxu0 0
      %1046 = vmatprep.subr.bf16.mxu0 0
      %1047 = vmatpush1.bf16.msra.mxu0 0
      %1048 = vmatprep.subr.bf16.mxu0 0
      %1049 = vmatpush1.bf16.msra.mxu0 0
      %1050 = vmatprep.subr.bf16.mxu0 0
      %1051 = vmatpush1.bf16.msra.mxu0 0
      %1052 = vmatprep.subr.bf16.mxu0 0
      %1053 = vmatpush1.bf16.msra.mxu0 0
      %1054 = vmatprep.subr.bf16.mxu0 0
      %1055 = vmatpush1.bf16.msra.mxu0 0
      %1056 = vmatprep.subr.bf16.mxu0 0
      %1057 = vmatpush1.bf16.msra.mxu0 0
      %1058 = vmatprep.subr.bf16.mxu0 0
      %1059 = vmatpush1.bf16.msra.mxu0 0
      %1060 = vmatprep.subr.bf16.mxu0 0
      %1061 = vmatpush1.bf16.msra.mxu0 0
      %1062 = vmatprep.subr.bf16.mxu0 0
      %1063 = vmatpush1.bf16.msra.mxu0 0
      %1064 = vmatprep.subr.bf16.mxu0 0
      %1065 = vmatpush1.bf16.msra.mxu0 0
      %1066 = vmatprep.subr.bf16.mxu0 0
      %1067 = vmatpush1.bf16.msra.mxu0 0
      %1068 = vmatprep.mubr.bf16.mxu0 0
      %1069 = vmatmul.mubr.bf16.gmra.mrb[0].mxu0 %v895
      %v1070 = vpop.f32.mrb[0].mxu0
      %v1071 = vadd.f32 %v1006, %v1070
      %v1072 = vpop.f32.mrb[0].mxu0
      %v1073 = vpop.f32.mrb[0].mxu0
      %v1074 = vadd.f32 %v1009, %v1073
      %v1075 = vpop.f32.mrb[0].mxu0
      %1076 = vmatprep.mubr.bf16.mxu0 0
      %1077 = vmatmul.mubr.bf16.gmra.mrb[0].mxu0 %v898
      %v1078 = vpop.f32.mrb[0].mxu0
      %v1079 = vadd.f32 %v1014, %v1078
      %v1080 = vpop.f32.mrb[0].mxu0
      %v1081 = vpop.f32.mrb[0].mxu0
      %v1082 = vadd.f32 %v1017, %v1081
      %v1083 = vpop.f32.mrb[0].mxu0
      %1084 = vmatprep.mubr.bf16.mxu0 0
      %1085 = vmatmul.mubr.bf16.gmra.mrb[0].mxu0 %v901
      %v1086 = vpop.f32.mrb[0].mxu0
      %v1087 = vadd.f32 %v1022, %v1086
      %v1088 = vpop.f32.mrb[0].mxu0
      %v1089 = vpop.f32.mrb[0].mxu0
      %v1090 = vadd.f32 %v1025, %v1089
      %v1091 = vpop.f32.mrb[0].mxu0
      %1092 = vmatprep.mubr.bf16.mxu0 0
      %1093 = vmatmul.mubr.bf16.gmra.mrb[0].mxu0 %v904
      %v1094 = vpop.f32.mrb[0].mxu0
      %v1095 = vadd.f32 %v1030, %v1094
      %v1096 = vpop.f32.mrb[0].mxu0
      %v1097 = vpop.f32.mrb[0].mxu0
      %v1098 = vadd.f32 %v1033, %v1097
      %v1099 = vpop.f32.mrb[0].mxu0
      %1100 = vdwg.mxu0
      %v1101 = vsel %vm562, %v1071, 0.0
      %v1102 = vsel %vm562, %v1074, 0.0
      %v1103 = vadd.f32 %v1101, %v1102
      %v1104 = vsel %vm562, %v1079, 0.0
      %v1105 = vadd.f32 %v1103, %v1104
      %v1106 = vsel %vm562, %v1082, 0.0
      %v1107 = vadd.f32 %v1105, %v1106
      %v1108 = vsel %vm562, %v1087, 0.0
      %v1109 = vadd.f32 %v1107, %v1108
      %v1110 = vsel %vm562, %v1090, 0.0
      %v1111 = vadd.f32 %v1109, %v1110
      %v1112 = vsel %vm562, %v1095, 0.0
      %v1113 = vadd.f32 %v1111, %v1112
      %v1114 = vsel %vm562, %v1098, 0.0
      %v1115 = vadd.f32 %v1113, %v1114
      %v1116 = vrot.slane %v1115, 4
      %v1117 = vadd.f32 %v1115, %v1116
      %v1118 = vrot.slane %v1117, 2
      %v1119 = vadd.f32 %v1117, %v1118
      %v1120 = vrot.slane %v1119, 1
      %v1121 = vadd.f32 %v1119, %v1120
      %vm1122 = vcmask 516096
      %1123 = vst.msk [vmem:[%s265] sm:$0x1] %vm1122, %v1121
      %v1124 = vmul.f32 %v1071, %v1071
      %v1125 = vmul.f32 %v1074, %v1074
      %v1126 = vmul.f32 %v1079, %v1079
      %v1127 = vmul.f32 %v1082, %v1082
      %v1128 = vmul.f32 %v1087, %v1087
      %v1129 = vmul.f32 %v1090, %v1090
      %v1130 = vmul.f32 %v1095, %v1095
      %v1131 = vmul.f32 %v1098, %v1098
      %v1132 = vsel %vm562, %v1124, 0.0
      %v1133 = vsel %vm562, %v1125, 0.0
      %v1134 = vadd.f32 %v1132, %v1133
      %v1135 = vsel %vm562, %v1126, 0.0
      %v1136 = vadd.f32 %v1134, %v1135
      %v1137 = vsel %vm562, %v1127, 0.0
      %v1138 = vadd.f32 %v1136, %v1137
      %v1139 = vsel %vm562, %v1128, 0.0
      %v1140 = vadd.f32 %v1138, %v1139
      %v1141 = vsel %vm562, %v1129, 0.0
      %v1142 = vadd.f32 %v1140, %v1141
      %v1143 = vsel %vm562, %v1130, 0.0
      %v1144 = vadd.f32 %v1142, %v1143
      %v1145 = vsel %vm562, %v1131, 0.0
      %v1146 = vadd.f32 %v1144, %v1145
      %v1147 = vrot.slane %v1146, 4
      %v1148 = vadd.f32 %v1146, %v1147
      %v1149 = vrot.slane %v1148, 2
      %v1150 = vadd.f32 %v1148, %v1149
      %v1151 = vrot.slane %v1150, 1
      %v1152 = vadd.f32 %v1150, %v1151
      %1153 = vst.msk [vmem:[%s268] sm:$0x1] %vm1122, %v1152
      %v1154 = vpack.c.bf16 %v1071, %v1071
      %v1155 = vpack.c.bf16 %v1074, %v1074
      %v1156 = vpack.c.bf16 %v1079, %v1079
      %v1157 = vpack.c.bf16 %v1082, %v1082
      %v1158 = vpack.c.bf16 %v1087, %v1087
      %v1159 = vpack.c.bf16 %v1090, %v1090
      %v1160 = vpack.c.bf16 %v1095, %v1095
      %v1161 = vpack.c.bf16 %v1098, %v1098
      %vm1162 = vcmask 519168
      %1163 = vst.msk [vmem:[%s262] sm:$0xf] %vm1162, %v1154
      %1164 = vst.msk [vmem:[%s262 + $0x4] sm:$0xf] %vm1162, %v1155
      %1165 = vst.msk [vmem:[%s262 + $0x8] sm:$0xf] %vm1162, %v1156
      %1166 = vst.msk [vmem:[%s262 + $0xc] sm:$0xf] %vm1162, %v1157
      %1167 = vst.msk [vmem:[%s262 + $0x10] sm:$0xf] %vm1162, %v1158
      %1168 = vst.msk [vmem:[%s262 + $0x14] sm:$0xf] %vm1162, %v1159
      %1169 = vst.msk [vmem:[%s262 + $0x18] sm:$0xf] %vm1162, %v1160
      %1170 = vst.msk [vmem:[%s262 + $0x1c] sm:$0xf] %vm1162, %v1161
      %p1171 = scmp.lt.s32.totalorder %s18, 1
      %s1172 = scalar_select %p1171, %s18, 1
      %s1173 = smul.addr %s1172, 8
      %s1174 = smul.addr %s1173, 4
      %s1175 = scalar_lea.vmem %s4, %s1174
      %p1176 = scmp.lt.s32.totalorder %s18, 1
      %s1177 = scalar_select %p1176, %s18, 1
      %s1178 = scalar_lea.vmem %s5, %s1177
      %p1179 = scmp.lt.s32.totalorder %s18, 1
      %s1180 = scalar_select %p1179, %s18, 1
      %s1181 = scalar_lea.vmem %s6, %s1180
      // Predicated region
      $region37: #{_lambda_.5} parent=35 // pred_check
        %p1182 = pneg %p125
      $region38: #{_lambda_.5} parent=35 // pred_check_branch
        %1184 = sbr.rel (%p1182) target = $region40
      $region39: #{_lambda_.5} parent=35 // pred_region
        _
      $region40: #{_lambda_.5} parent=35 // pred_fallthru
        _
      // Predicated region
      $region41: #{_lambda_.5} parent=35 // pred_check
        %p1185 = pneg %p151
      $region42: #{_lambda_.5} parent=35 // pred_check_branch
        %1187 = sbr.rel (%p1185) target = $region44
      $region43: #{_lambda_.5} parent=35 // pred_region
        _
      $region44: #{_lambda_.5} parent=35 // pred_fallthru
        _
      // Predicated region
      $region45: #{_lambda_.5} parent=35 // pred_check
        %p1188 = pneg %p177
      $region46: #{_lambda_.5} parent=35 // pred_check_branch
        %1190 = sbr.rel (%p1188) target = $region48
      $region47: #{_lambda_.5} parent=35 // pred_region
        _
      $region48: #{_lambda_.5} parent=35 // pred_fallthru
        _
    $region36: #{_lambda_.5} parent=5 // pred_fallthru
      _
    %p1191 = scmp.le.s32.totalorder 2, %s13
    // Predicated region
    $region49: #{_lambda_.5} parent=5 // pred_check
      %p1192 = pneg %p1191
    $region50: #{_lambda_.5} parent=5 // pred_check_branch
      %1194 = sbr.rel (%p1192) target = $region52
    $region51: #{_lambda_.5} parent=5 // pred_region
      %s1195 = ssub.s32 %s13, 2
      // Predicated region
      $region53: #{_lambda_.5} parent=51 // pred_check
        %p1196 = pneg %p131
      $region54: #{_lambda_.5} parent=51 // pred_check_branch
        %1198 = sbr.rel (%p1196) target = $region56
      $region55: #{_lambda_.5} parent=51 // pred_region
        %p1199 = scmp.lt.s32.totalorder %s19, 1
        %s1200 = scalar_select %p1199, %s19, 1
        %s1201 = smul.addr %s1200, 8
        %s1202 = smul.addr %s1201, 4
        %s1203 = scalar_lea.vmem %s4, %s1202
      $region56: #{_lambda_.5} parent=51 // pred_fallthru
        _
      // Predicated region
      $region57: #{_lambda_.5} parent=51 // pred_check
        %p1204 = pneg %p157
      $region58: #{_lambda_.5} parent=51 // pred_check_branch
        %1206 = sbr.rel (%p1204) target = $region60
      $region59: #{_lambda_.5} parent=51 // pred_region
        %p1207 = scmp.lt.s32.totalorder %s19, 1
        %s1208 = scalar_select %p1207, %s19, 1
        %s1209 = scalar_lea.vmem %s5, %s1208
      $region60: #{_lambda_.5} parent=51 // pred_fallthru
        _
      // Predicated region
      $region61: #{_lambda_.5} parent=51 // pred_check
        %p1210 = pneg %p183
      $region62: #{_lambda_.5} parent=51 // pred_check_branch
        %1212 = sbr.rel (%p1210) target = $region64
      $region63: #{_lambda_.5} parent=51 // pred_region
        %p1213 = scmp.lt.s32.totalorder %s19, 1
        %s1214 = scalar_select %p1213, %s19, 1
        %s1215 = scalar_lea.vmem %s6, %s1214
      $region64: #{_lambda_.5} parent=51 // pred_fallthru
        _
    $region52: #{_lambda_.5} parent=5 // pred_fallthru
      _
  $region6: #{_lambda_.5} parent=0 // loop_footer
    %s17 = sadd.s32 1, %s13
  $region7: #{_lambda_.5} parent=0 // loop_footer_branch
    %12 = sbr.rel target = $region3
  $region8: #{_lambda_.5} parent=0 // loop_exit
    _

</llo_original>
